<compile_context>
chip_gen: v5e
topology: v5e:2x2
jax: 0.10.0
libtpu: 0.0.40
codegen_flags: <defaults>
</compile_context>

<pallas_src>
import functools

import jax
import jax.numpy as jnp
from jax import lax
from jax.experimental import pallas as pl
from jax.experimental.pallas import tpu as pltpu

EPS = 1e-5       # PyTorch BatchNorm1d default eps
LANES = 128      # TPU lane width; packed feature dims are zero-padded to this
OUT_PAD = 8      # stored output width (>= action_size); padded columns are exactly 0


def make_actor_kernel(state_size, out_cols):
    S = state_size

    def actor_kernel(x_ref, vec_ref, w_ref, out_ref):
        x = x_ref[...].astype(jnp.float32)            # (B, S)
        B = x.shape[0]
        inv_b = 1.0 / B
        ones_row = jnp.ones((1, B), jnp.float32)       # MXU reduction vector

        vec = vec_ref[...]                             # (8, 128) packed per-feature vectors
        g0 = vec[0:1, :S]
        g1, b1 = vec[2:3, :], vec[3:4, :]              # padded lanes are zero
        g2, b2 = vec[4:5, :], vec[5:6, :]
        c3 = vec[6:7, :out_cols]

        def moments(h):
            # Batch mean / variance via the (nearly idle) MXU: ones(1,B) @ h.
            m = jnp.dot(ones_row, h, preferred_element_type=jnp.float32) * inv_b
            sq = jnp.dot(ones_row, h * h, preferred_element_type=jnp.float32) * inv_b
            var = jnp.maximum(sq - m * m, 0.0)         # clamp tiny negative cancellation
            return m, var

        # ---- bn0 folded into a row-scale of w1 ------------------------------------
        # bn0's shift (b0 - mean0*s0) propagates through fc1 as a per-column constant
        # that bn1's mean subtraction cancels exactly, so only the scale s0 survives.
        _, v0 = moments(x)
        s0 = g0 * lax.rsqrt(v0 + EPS)                  # (1, S)
        rr = lax.broadcasted_iota(jnp.int32, (S, S), 0)
        cc = lax.broadcasted_iota(jnp.int32, (S, S), 1)
        diag_s0 = jnp.where(rr == cc, s0, 0.0)         # diag(s0), lane->sublane via MXU
        w1 = w_ref[pl.ds(0, S), :]                     # (S, 128), cols >= fc1_units are zero
        w1s = jnp.dot(diag_s0, w1, preferred_element_type=jnp.float32)

        # ---- fc1 -> bn1 -> relu  (fc1 bias cancelled by bn1's mean subtraction) ---
        z1 = jnp.dot(x, w1s, preferred_element_type=jnp.float32)
        m1, v1 = moments(z1)
        sc1 = g1 * lax.rsqrt(v1 + EPS)
        sh1 = b1 - m1 * sc1
        h1 = jnp.maximum(z1 * sc1 + sh1, 0.0)

        # ---- fc2 -> bn2 -> relu  (fc2 bias likewise cancelled) ---------------------
        w2 = w_ref[pl.ds(S, LANES), :]                 # (128, 128), zero-padded
        z2 = jnp.dot(h1, w2, preferred_element_type=jnp.float32)
        m2, v2 = moments(z2)
        sc2 = g2 * lax.rsqrt(v2 + EPS)
        sh2 = b2 - m2 * sc2
        h2 = jnp.maximum(z2 * sc2 + sh2, 0.0)

        # ---- fc3 -> tanh (narrow store: only out_cols columns written back) -------
        w3 = w_ref[pl.ds(S + LANES, LANES), :]         # (128, 128), zero-padded
        a = jnp.dot(h2, w3, preferred_element_type=jnp.float32)
        a = a[:, :out_cols] + c3                       # padded columns stay exactly 0
        out_ref[...] = jnp.tanh(a).astype(out_ref.dtype)

    return actor_kernel


@functools.partial(jax.jit, static_argnames=("out_cols",))
def actor_forward(state, vec_slab, w_slab, *, out_cols=OUT_PAD):
    """Returns a (B, out_cols) slab; the first action_size columns are the actions,
    the remaining columns are exactly zero (consumers read them directly; no extra
    slicing op / HBM round trip inside the jit)."""
    B, S = state.shape
    vmem = pl.BlockSpec(memory_space=pltpu.MemorySpace.VMEM)
    return pl.pallas_call(
        make_actor_kernel(S, out_cols),
        out_shape=jax.ShapeDtypeStruct((B, out_cols), jnp.float32),
        in_specs=[vmem, vmem, vmem],
        out_specs=vmem,
        compiler_params=pltpu.CompilerParams(vmem_limit_bytes=32 * 1024 * 1024),
    )(state, vec_slab, w_slab)


def init_params(key, state_size, action_size, fc1_units, fc2_units):
    """Deterministic init mimicking Actor.__init__/reset_parameters ranges."""
    ks = jax.random.split(key, 6)

    def uniform(k, shape, lim):
        return jax.random.uniform(k, shape, jnp.float32, -lim, lim)

    # hidden_init uses weight.size()[0] == out_features in PyTorch
    lim1 = 1.0 / jnp.sqrt(fc1_units)
    lim2 = 1.0 / jnp.sqrt(fc2_units)

    return {
        # BatchNorm affine params (PyTorch default: gamma=1, beta=0)
        "g0": jnp.ones((1, state_size), jnp.float32),
        "b0": jnp.zeros((1, state_size), jnp.float32),
        "g1": jnp.ones((1, fc1_units), jnp.float32),
        "b1": jnp.zeros((1, fc1_units), jnp.float32),
        "g2": jnp.ones((1, fc2_units), jnp.float32),
        "b2": jnp.zeros((1, fc2_units), jnp.float32),
        # Linear weights stored (in, out)
        "w1": uniform(ks[0], (state_size, fc1_units), lim1),
        "c1": uniform(ks[1], (1, fc1_units), 1.0 / jnp.sqrt(state_size)),   # ref only
        "w2": uniform(ks[2], (fc1_units, fc2_units), lim2),
        "c2": uniform(ks[3], (1, fc2_units), 1.0 / jnp.sqrt(fc1_units)),    # ref only
        "w3": uniform(ks[4], (fc2_units, action_size), 0.003),
        "c3": uniform(ks[5], (1, action_size), 1.0 / jnp.sqrt(fc2_units)),
    }


def pack_params(params, state_size, action_size, fc1_units, fc2_units):
    """Pack the used parameter tensors into two lane-padded slabs (done once, offline)."""
    assert max(fc1_units, fc2_units, action_size, state_size) <= LANES
    assert action_size <= OUT_PAD
    assert state_size % 8 == 0, "keep the weight-slab row boundaries sublane-aligned"

    def row(v, n):
        return jnp.zeros((LANES,), jnp.float32).at[:n].set(jnp.reshape(v, (-1,)))

    vec_slab = jnp.stack([
        row(params["g0"], state_size), row(params["b0"], state_size),  # b0 kept for layout; unused
        row(params["g1"], fc1_units), row(params["b1"], fc1_units),
        row(params["g2"], fc2_units), row(params["b2"], fc2_units),
        row(params["c3"], action_size),
        jnp.zeros((LANES,), jnp.float32),
    ])                                                            # (8, 128)

    w1p = jnp.zeros((state_size, LANES), jnp.float32).at[:, :fc1_units].set(params["w1"])
    w2p = jnp.zeros((LANES, LANES), jnp.float32).at[:fc1_units, :fc2_units].set(params["w2"])
    w3p = jnp.zeros((LANES, LANES), jnp.float32).at[:fc2_units, :action_size].set(params["w3"])
    w_slab = jnp.concatenate([w1p, w2p, w3p], axis=0)             # (S + 256, 128)
    return vec_slab, w_slab


def actor_reference(state, params):
    """Pure-JAX reference with the full original math (all biases, centered variance)."""
    def bn(x, g, b):
        m = jnp.mean(x, axis=0, keepdims=True)
        v = jnp.mean(jnp.square(x - m), axis=0, keepdims=True)
        return (x - m) / jnp.sqrt(v + EPS) * g + b

    x = bn(state, params["g0"], params["b0"])
    h1 = jax.nn.relu(bn(x @ params["w1"] + params["c1"], params["g1"], params["b1"]))
    h2 = jax.nn.relu(bn(h1 @ params["w2"] + params["c2"], params["g2"], params["b2"]))
    return jnp.tanh(h2 @ params["w3"] + params["c3"])


if __name__ == "__main__":
    # Tennis-env-like feature sizes (state_size=24, action_size=2); batch of stacked
    # agent/env-step states so the single fused call amortizes dispatch/DMA overhead.
    B, STATE, ACTION, FC1, FC2 = 512, 24, 2, 64, 32

    key = jax.random.PRNGKey(0)
    k_state, k_params = jax.random.split(key)
    state = jax.random.normal(k_state, (B, STATE), jnp.float32)
    params = init_params(k_params, STATE, ACTION, FC1, FC2)
    vec_slab, w_slab = pack_params(params, STATE, ACTION, FC1, FC2)

    out = actor_forward(state, vec_slab, w_slab)
    jax.block_until_ready(out)

    ref = actor_reference(state, params)
    act = out[:, :ACTION]
    assert out.shape == (B, OUT_PAD)
    assert bool(jnp.all(out[:, ACTION:] == 0.0)), "padded output columns must be exactly zero"
    assert jnp.allclose(act, ref, atol=1e-4, rtol=1e-4), float(jnp.max(jnp.abs(act - ref)))

    print("KERNEL_OK")
</pallas_src>

<mosaic_0001>
module attributes {stable_mosaic.version = 11 : i64} {
  func.func @actor_kernel(%arg0: memref<512x24xf32, #tpu.memory_space<vmem>>, %arg1: memref<8x128xf32, #tpu.memory_space<vmem>>, %arg2: memref<280x128xf32, #tpu.memory_space<vmem>>, %arg3: memref<512x8xf32, #tpu.memory_space<vmem>>) attributes {dimension_semantics = [], scalar_prefetch = 0 : i64, scratch_operands = 0 : i64, tpu.core_type = #tpu.core_type<tc>} {
    %c0 = arith.constant 0 : index
    %c0_0 = arith.constant 0 : index
    %0 = vector.load %arg0[%c0, %c0_0] : memref<512x24xf32, #tpu.memory_space<vmem>>, vector<512x24xf32>
    %cst = arith.constant 1.000000e+00 : f32
    %1 = vector.broadcast %cst : f32 to vector<1x512xf32>
    %c0_1 = arith.constant 0 : index
    %c0_2 = arith.constant 0 : index
    %2 = vector.load %arg1[%c0_1, %c0_2] : memref<8x128xf32, #tpu.memory_space<vmem>>, vector<8x128xf32>
    %3 = vector.extract_strided_slice %2 {offsets = [0, 0], sizes = [1, 24], strides = [1, 1]} : vector<8x128xf32> to vector<1x24xf32>
    %4 = vector.extract_strided_slice %2 {offsets = [2, 0], sizes = [1, 128], strides = [1, 1]} : vector<8x128xf32> to vector<1x128xf32>
    %5 = vector.extract_strided_slice %2 {offsets = [3, 0], sizes = [1, 128], strides = [1, 1]} : vector<8x128xf32> to vector<1x128xf32>
    %6 = vector.extract_strided_slice %2 {offsets = [4, 0], sizes = [1, 128], strides = [1, 1]} : vector<8x128xf32> to vector<1x128xf32>
    %7 = vector.extract_strided_slice %2 {offsets = [5, 0], sizes = [1, 128], strides = [1, 1]} : vector<8x128xf32> to vector<1x128xf32>
    %8 = vector.extract_strided_slice %2 {offsets = [6, 0], sizes = [1, 8], strides = [1, 1]} : vector<8x128xf32> to vector<1x8xf32>
    %cst_3 = arith.constant dense<0.000000e+00> : vector<1x24xf32>
    %9 = tpu.matmul %1, %0, %cst_3 {dimension_numbers = #tpu.dot_dimension_numbers<[1], [0], [0], [1], [0, 0, 1, 1], [], []>} : vector<1x512xf32>, vector<512x24xf32>, vector<1x24xf32> -> vector<1x24xf32>
    %cst_4 = arith.constant 0.001953125 : f32
    %10 = vector.broadcast %cst_4 : f32 to vector<1x24xf32>
    %11 = arith.mulf %9, %10 : vector<1x24xf32>
    %12 = arith.mulf %0, %0 : vector<512x24xf32>
    %cst_5 = arith.constant dense<0.000000e+00> : vector<1x24xf32>
    %13 = tpu.matmul %1, %12, %cst_5 {dimension_numbers = #tpu.dot_dimension_numbers<[1], [0], [0], [1], [0, 0, 1, 1], [], []>} : vector<1x512xf32>, vector<512x24xf32>, vector<1x24xf32> -> vector<1x24xf32>
    %cst_6 = arith.constant 0.001953125 : f32
    %14 = vector.broadcast %cst_6 : f32 to vector<1x24xf32>
    %15 = arith.mulf %13, %14 : vector<1x24xf32>
    %16 = arith.mulf %11, %11 : vector<1x24xf32>
    %17 = arith.subf %15, %16 : vector<1x24xf32>
    %cst_7 = arith.constant 0.000000e+00 : f32
    %18 = vector.broadcast %cst_7 : f32 to vector<1x24xf32>
    %19 = arith.maximumf %17, %18 : vector<1x24xf32>
    %cst_8 = arith.constant 9.99999974E-6 : f32
    %20 = vector.broadcast %cst_8 : f32 to vector<1x24xf32>
    %21 = arith.addf %19, %20 : vector<1x24xf32>
    %22 = math.rsqrt %21 : vector<1x24xf32>
    %23 = arith.mulf %3, %22 : vector<1x24xf32>
    %24 = tpu.iota {dimensions = array<i32: 0>} : vector<24x24xi32>
    %25 = tpu.iota {dimensions = array<i32: 1>} : vector<24x24xi32>
    %26 = arith.cmpi eq, %24, %25 : vector<24x24xi32>
    %cst_9 = arith.constant 0.000000e+00 : f32
    %27 = vector.shape_cast %23 : vector<1x24xf32> to vector<1x24xf32>
    %28 = vector.broadcast %27 : vector<1x24xf32> to vector<24x24xf32>
    %29 = vector.broadcast %cst_9 : f32 to vector<24x24xf32>
    %30 = arith.select %26, %28, %29 : vector<24x24xi1>, vector<24x24xf32>
    %c0_10 = arith.constant 0 : index
    %c0_11 = arith.constant 0 : index
    %31 = vector.load %arg2[%c0_10, %c0_11] : memref<280x128xf32, #tpu.memory_space<vmem>>, vector<24x128xf32>
    %cst_12 = arith.constant dense<0.000000e+00> : vector<24x128xf32>
    %32 = tpu.matmul %30, %31, %cst_12 {dimension_numbers = #tpu.dot_dimension_numbers<[1], [0], [0], [1], [0, 0, 1, 1], [], []>} : vector<24x24xf32>, vector<24x128xf32>, vector<24x128xf32> -> vector<24x128xf32>
    %cst_13 = arith.constant dense<0.000000e+00> : vector<512x128xf32>
    %33 = tpu.matmul %0, %32, %cst_13 {dimension_numbers = #tpu.dot_dimension_numbers<[1], [0], [0], [1], [0, 0, 1, 1], [], []>} : vector<512x24xf32>, vector<24x128xf32>, vector<512x128xf32> -> vector<512x128xf32>
    %cst_14 = arith.constant dense<0.000000e+00> : vector<1x128xf32>
    %34 = tpu.matmul %1, %33, %cst_14 {dimension_numbers = #tpu.dot_dimension_numbers<[1], [0], [0], [1], [0, 0, 1, 1], [], []>} : vector<1x512xf32>, vector<512x128xf32>, vector<1x128xf32> -> vector<1x128xf32>
    %cst_15 = arith.constant 0.001953125 : f32
    %35 = vector.broadcast %cst_15 : f32 to vector<1x128xf32>
    %36 = arith.mulf %34, %35 : vector<1x128xf32>
    %37 = arith.mulf %33, %33 : vector<512x128xf32>
    %cst_16 = arith.constant dense<0.000000e+00> : vector<1x128xf32>
    %38 = tpu.matmul %1, %37, %cst_16 {dimension_numbers = #tpu.dot_dimension_numbers<[1], [0], [0], [1], [0, 0, 1, 1], [], []>} : vector<1x512xf32>, vector<512x128xf32>, vector<1x128xf32> -> vector<1x128xf32>
    %cst_17 = arith.constant 0.001953125 : f32
    %39 = vector.broadcast %cst_17 : f32 to vector<1x128xf32>
    %40 = arith.mulf %38, %39 : vector<1x128xf32>
    %41 = arith.mulf %36, %36 : vector<1x128xf32>
    %42 = arith.subf %40, %41 : vector<1x128xf32>
    %cst_18 = arith.constant 0.000000e+00 : f32
    %43 = vector.broadcast %cst_18 : f32 to vector<1x128xf32>
    %44 = arith.maximumf %42, %43 : vector<1x128xf32>
    %cst_19 = arith.constant 9.99999974E-6 : f32
    %45 = vector.broadcast %cst_19 : f32 to vector<1x128xf32>
    %46 = arith.addf %44, %45 : vector<1x128xf32>
    %47 = math.rsqrt %46 : vector<1x128xf32>
    %48 = arith.mulf %4, %47 : vector<1x128xf32>
    %49 = arith.mulf %36, %48 : vector<1x128xf32>
    %50 = arith.subf %5, %49 : vector<1x128xf32>
    %51 = vector.broadcast %48 : vector<1x128xf32> to vector<512x128xf32>
    %52 = arith.mulf %33, %51 : vector<512x128xf32>
    %53 = vector.broadcast %50 : vector<1x128xf32> to vector<512x128xf32>
    %54 = arith.addf %52, %53 : vector<512x128xf32>
    %cst_20 = arith.constant 0.000000e+00 : f32
    %55 = vector.broadcast %cst_20 : f32 to vector<512x128xf32>
    %56 = arith.maximumf %54, %55 : vector<512x128xf32>
    %c24 = arith.constant 24 : index
    %c0_21 = arith.constant 0 : index
    %57 = vector.load %arg2[%c24, %c0_21] : memref<280x128xf32, #tpu.memory_space<vmem>>, vector<128x128xf32>
    %cst_22 = arith.constant dense<0.000000e+00> : vector<512x128xf32>
    %58 = tpu.matmul %56, %57, %cst_22 {dimension_numbers = #tpu.dot_dimension_numbers<[1], [0], [0], [1], [0, 0, 1, 1], [], []>} : vector<512x128xf32>, vector<128x128xf32>, vector<512x128xf32> -> vector<512x128xf32>
    %cst_23 = arith.constant dense<0.000000e+00> : vector<1x128xf32>
    %59 = tpu.matmul %1, %58, %cst_23 {dimension_numbers = #tpu.dot_dimension_numbers<[1], [0], [0], [1], [0, 0, 1, 1], [], []>} : vector<1x512xf32>, vector<512x128xf32>, vector<1x128xf32> -> vector<1x128xf32>
    %cst_24 = arith.constant 0.001953125 : f32
    %60 = vector.broadcast %cst_24 : f32 to vector<1x128xf32>
    %61 = arith.mulf %59, %60 : vector<1x128xf32>
    %62 = arith.mulf %58, %58 : vector<512x128xf32>
    %cst_25 = arith.constant dense<0.000000e+00> : vector<1x128xf32>
    %63 = tpu.matmul %1, %62, %cst_25 {dimension_numbers = #tpu.dot_dimension_numbers<[1], [0], [0], [1], [0, 0, 1, 1], [], []>} : vector<1x512xf32>, vector<512x128xf32>, vector<1x128xf32> -> vector<1x128xf32>
    %cst_26 = arith.constant 0.001953125 : f32
    %64 = vector.broadcast %cst_26 : f32 to vector<1x128xf32>
    %65 = arith.mulf %63, %64 : vector<1x128xf32>
    %66 = arith.mulf %61, %61 : vector<1x128xf32>
    %67 = arith.subf %65, %66 : vector<1x128xf32>
    %cst_27 = arith.constant 0.000000e+00 : f32
    %68 = vector.broadcast %cst_27 : f32 to vector<1x128xf32>
    %69 = arith.maximumf %67, %68 : vector<1x128xf32>
    %cst_28 = arith.constant 9.99999974E-6 : f32
    %70 = vector.broadcast %cst_28 : f32 to vector<1x128xf32>
    %71 = arith.addf %69, %70 : vector<1x128xf32>
    %72 = math.rsqrt %71 : vector<1x128xf32>
    %73 = arith.mulf %6, %72 : vector<1x128xf32>
    %74 = arith.mulf %61, %73 : vector<1x128xf32>
    %75 = arith.subf %7, %74 : vector<1x128xf32>
    %76 = vector.broadcast %73 : vector<1x128xf32> to vector<512x128xf32>
    %77 = arith.mulf %58, %76 : vector<512x128xf32>
    %78 = vector.broadcast %75 : vector<1x128xf32> to vector<512x128xf32>
    %79 = arith.addf %77, %78 : vector<512x128xf32>
    %cst_29 = arith.constant 0.000000e+00 : f32
    %80 = vector.broadcast %cst_29 : f32 to vector<512x128xf32>
    %81 = arith.maximumf %79, %80 : vector<512x128xf32>
    %c152 = arith.constant 152 : index
    %c0_30 = arith.constant 0 : index
    %82 = vector.load %arg2[%c152, %c0_30] : memref<280x128xf32, #tpu.memory_space<vmem>>, vector<128x128xf32>
    %cst_31 = arith.constant dense<0.000000e+00> : vector<512x128xf32>
    %83 = tpu.matmul %81, %82, %cst_31 {dimension_numbers = #tpu.dot_dimension_numbers<[1], [0], [0], [1], [0, 0, 1, 1], [], []>} : vector<512x128xf32>, vector<128x128xf32>, vector<512x128xf32> -> vector<512x128xf32>
    %84 = vector.extract_strided_slice %83 {offsets = [0, 0], sizes = [512, 8], strides = [1, 1]} : vector<512x128xf32> to vector<512x8xf32>
    %85 = vector.broadcast %8 : vector<1x8xf32> to vector<512x8xf32>
    %86 = arith.addf %84, %85 : vector<512x8xf32>
    %87 = math.tanh %86 : vector<512x8xf32>
    %c0_32 = arith.constant 0 : index
    %c0_33 = arith.constant 0 : index
    %88 = vector.load %arg3[%c0_32, %c0_33] : memref<512x8xf32, #tpu.memory_space<vmem>>, vector<512x8xf32>
    tpu.vector_store %arg3[%c0_32, %c0_33], %87 {strides = array<i32>} : memref<512x8xf32, #tpu.memory_space<vmem>>, vector<512x8xf32>,
    return
  }
}

</mosaic_0001>

<llo_original>
// kernel: actor_forward.1
$region0: #{actor_forward.1}
  #allocation0 [shape = 'u32[]', space=smem, size = 0x4, offset = 0x4, fixed_abs, tag = 'smem constant byte address 0x4 - core index']
  #allocation1 [shape = 'u32[72,128]{1,0:T(1,128)}', space=vmem, size = 0x9000, scoped, tag = 'internal scratch']
  %s0 = inlined_call_operand.vmem [shape: f32[512,24], index: 0, kind: input, shape index: {}]
  %s1 = inlined_call_operand.vmem [shape: f32[8,128], index: 1, kind: input, shape index: {}]
  %s2 = inlined_call_operand.vmem [shape: f32[280,128], index: 2, kind: input, shape index: {}]
  %s3 = inlined_call_operand.vmem [shape: f32[512,8], index: 3, kind: output, shape index: {}]
  %s4 = sld [smem:[#allocation0]]
  $region22: #{actor_forward.1} parent=0
    _
  %s6 = ssub.s32 1, %s4
  %s7 = scalar_select 0, %s6, %s4
  // Predicated region
  $region2: #{actor_forward.1} parent=0 // pred_check
    _
  $region3: #{actor_forward.1} parent=0 // pred_check_branch
    %9 = sbr.rel (0) target = $region5
  $region4: #{actor_forward.1} parent=0 // pred_region
    _
  $region5: #{actor_forward.1} parent=0 // pred_fallthru
    _
  // Predicated region
  $region6: #{actor_forward.1} parent=0 // pred_check
    _
  $region7: #{actor_forward.1} parent=0 // pred_check_branch
    %11 = sbr.rel (0) target = $region9
  $region8: #{actor_forward.1} parent=0 // pred_region
    _
  $region9: #{actor_forward.1} parent=0 // pred_fallthru
    _
  // Predicated region
  $region10: #{actor_forward.1} parent=0 // pred_check
    _
  $region11: #{actor_forward.1} parent=0 // pred_check_branch
    %13 = sbr.rel (0) target = $region13
  $region12: #{actor_forward.1} parent=0 // pred_region
    _
  $region13: #{actor_forward.1} parent=0 // pred_fallthru
    _
  %v14 = vld [vmem:[%s0] sm:$0xff]
  %v15 = vld [vmem:[%s0 + $0x8] sm:$0xff]
  %v16 = vld [vmem:[%s0 + $0x10] sm:$0xff]
  %v17 = vld [vmem:[%s0 + $0x18] sm:$0xff]
  %v18 = vld [vmem:[%s0 + $0x20] sm:$0xff]
  %v19 = vld [vmem:[%s0 + $0x28] sm:$0xff]
  %v20 = vld [vmem:[%s0 + $0x30] sm:$0xff]
  %v21 = vld [vmem:[%s0 + $0x38] sm:$0xff]
  %v22 = vld [vmem:[%s0 + $0x40] sm:$0xff]
  %v23 = vld [vmem:[%s0 + $0x48] sm:$0xff]
  %v24 = vld [vmem:[%s0 + $0x50] sm:$0xff]
  %v25 = vld [vmem:[%s0 + $0x58] sm:$0xff]
  %v26 = vld [vmem:[%s0 + $0x60] sm:$0xff]
  %v27 = vld [vmem:[%s0 + $0x68] sm:$0xff]
  %v28 = vld [vmem:[%s0 + $0x70] sm:$0xff]
  %v29 = vld [vmem:[%s0 + $0x78] sm:$0xff]
  %v30 = vld [vmem:[%s0 + $0x80] sm:$0xff]
  %v31 = vld [vmem:[%s0 + $0x88] sm:$0xff]
  %v32 = vld [vmem:[%s0 + $0x90] sm:$0xff]
  %v33 = vld [vmem:[%s0 + $0x98] sm:$0xff]
  %v34 = vld [vmem:[%s0 + $0xa0] sm:$0xff]
  %v35 = vld [vmem:[%s0 + $0xa8] sm:$0xff]
  %v36 = vld [vmem:[%s0 + $0xb0] sm:$0xff]
  %v37 = vld [vmem:[%s0 + $0xb8] sm:$0xff]
  %v38 = vld [vmem:[%s0 + $0xc0] sm:$0xff]
  %v39 = vld [vmem:[%s0 + $0xc8] sm:$0xff]
  %v40 = vld [vmem:[%s0 + $0xd0] sm:$0xff]
  %v41 = vld [vmem:[%s0 + $0xd8] sm:$0xff]
  %v42 = vld [vmem:[%s0 + $0xe0] sm:$0xff]
  %v43 = vld [vmem:[%s0 + $0xe8] sm:$0xff]
  %v44 = vld [vmem:[%s0 + $0xf0] sm:$0xff]
  %v45 = vld [vmem:[%s0 + $0xf8] sm:$0xff]
  %v46 = vld [vmem:[%s0 + $0x100] sm:$0xff]
  %v47 = vld [vmem:[%s0 + $0x108] sm:$0xff]
  %v48 = vld [vmem:[%s0 + $0x110] sm:$0xff]
  %v49 = vld [vmem:[%s0 + $0x118] sm:$0xff]
  %v50 = vld [vmem:[%s0 + $0x120] sm:$0xff]
  %v51 = vld [vmem:[%s0 + $0x128] sm:$0xff]
  %v52 = vld [vmem:[%s0 + $0x130] sm:$0xff]
  %v53 = vld [vmem:[%s0 + $0x138] sm:$0xff]
  %v54 = vld [vmem:[%s0 + $0x140] sm:$0xff]
  %v55 = vld [vmem:[%s0 + $0x148] sm:$0xff]
  %v56 = vld [vmem:[%s0 + $0x150] sm:$0xff]
  %v57 = vld [vmem:[%s0 + $0x158] sm:$0xff]
  %v58 = vld [vmem:[%s0 + $0x160] sm:$0xff]
  %v59 = vld [vmem:[%s0 + $0x168] sm:$0xff]
  %v60 = vld [vmem:[%s0 + $0x170] sm:$0xff]
  %v61 = vld [vmem:[%s0 + $0x178] sm:$0xff]
  %v62 = vld [vmem:[%s0 + $0x180] sm:$0xff]
  %v63 = vld [vmem:[%s0 + $0x188] sm:$0xff]
  %v64 = vld [vmem:[%s0 + $0x190] sm:$0xff]
  %v65 = vld [vmem:[%s0 + $0x198] sm:$0xff]
  %v66 = vld [vmem:[%s0 + $0x1a0] sm:$0xff]
  %v67 = vld [vmem:[%s0 + $0x1a8] sm:$0xff]
  %v68 = vld [vmem:[%s0 + $0x1b0] sm:$0xff]
  %v69 = vld [vmem:[%s0 + $0x1b8] sm:$0xff]
  %v70 = vld [vmem:[%s0 + $0x1c0] sm:$0xff]
  %v71 = vld [vmem:[%s0 + $0x1c8] sm:$0xff]
  %v72 = vld [vmem:[%s0 + $0x1d0] sm:$0xff]
  %v73 = vld [vmem:[%s0 + $0x1d8] sm:$0xff]
  %v74 = vld [vmem:[%s0 + $0x1e0] sm:$0xff]
  %v75 = vld [vmem:[%s0 + $0x1e8] sm:$0xff]
  %v76 = vld [vmem:[%s0 + $0x1f0] sm:$0xff]
  %v77 = vld [vmem:[%s0 + $0x1f8] sm:$0xff]
  %v78 = vld [vmem:[%s1] sm:$0xff]
  %79 = vmatpush.msra.mxu0 %v29
  %80 = vmatpush.msra.mxu0 %v28
  %81 = vmatpush.msra.mxu0 %v27
  %82 = vmatpush.msra.mxu0 %v26
  %83 = vmatpush.msra.mxu0 %v25
  %84 = vmatpush.msra.mxu0 %v24
  %85 = vmatpush.msra.mxu0 %v23
  %86 = vmatpush.msra.mxu0 %v22
  %87 = vmatpush.msra.mxu0 %v21
  %88 = vmatpush.msra.mxu0 %v20
  %89 = vmatpush.msra.mxu0 %v19
  %90 = vmatpush.msra.mxu0 %v18
  %91 = vmatpush.msra.mxu0 %v17
  %92 = vmatpush.msra.mxu0 %v16
  %93 = vmatpush.msra.mxu0 %v15
  %94 = vmatpush.msra.mxu0 %v14
  %95 = vmatmul.f32.gmra.mxu0 1.0
  %v96 = vpop.f32.mrf.mxu0
  %v97 = vadd.f32 0.0, %v96
  %98 = vdwg.mxu0
  %99 = vmatpush.msra.mxu0 %v45
  %100 = vmatpush.msra.mxu0 %v44
  %101 = vmatpush.msra.mxu0 %v43
  %102 = vmatpush.msra.mxu0 %v42
  %103 = vmatpush.msra.mxu0 %v41
  %104 = vmatpush.msra.mxu0 %v40
  %105 = vmatpush.msra.mxu0 %v39
  %106 = vmatpush.msra.mxu0 %v38
  %107 = vmatpush.msra.mxu0 %v37
  %108 = vmatpush.msra.mxu0 %v36
  %109 = vmatpush.msra.mxu0 %v35
  %110 = vmatpush.msra.mxu0 %v34
  %111 = vmatpush.msra.mxu0 %v33
  %112 = vmatpush.msra.mxu0 %v32
  %113 = vmatpush.msra.mxu0 %v31
  %114 = vmatpush.msra.mxu0 %v30
  %115 = vmatmul.f32.gmra.mxu0 1.0
  %v116 = vpop.f32.mrf.mxu0
  %v117 = vadd.f32 %v97, %v116
  %118 = vdwg.mxu0
  %119 = vmatpush.msra.mxu0 %v61
  %120 = vmatpush.msra.mxu0 %v60
  %121 = vmatpush.msra.mxu0 %v59
  %122 = vmatpush.msra.mxu0 %v58
  %123 = vmatpush.msra.mxu0 %v57
  %124 = vmatpush.msra.mxu0 %v56
  %125 = vmatpush.msra.mxu0 %v55
  %126 = vmatpush.msra.mxu0 %v54
  %127 = vmatpush.msra.mxu0 %v53
  %128 = vmatpush.msra.mxu0 %v52
  %129 = vmatpush.msra.mxu0 %v51
  %130 = vmatpush.msra.mxu0 %v50
  %131 = vmatpush.msra.mxu0 %v49
  %132 = vmatpush.msra.mxu0 %v48
  %133 = vmatpush.msra.mxu0 %v47
  %134 = vmatpush.msra.mxu0 %v46
  %135 = vmatmul.f32.gmra.mxu0 1.0
  %v136 = vpop.f32.mrf.mxu0
  %v137 = vadd.f32 %v117, %v136
  %138 = vdwg.mxu0
  %139 = vmatpush.msra.mxu0 %v77
  %140 = vmatpush.msra.mxu0 %v76
  %141 = vmatpush.msra.mxu0 %v75
  %142 = vmatpush.msra.mxu0 %v74
  %143 = vmatpush.msra.mxu0 %v73
  %144 = vmatpush.msra.mxu0 %v72
  %145 = vmatpush.msra.mxu0 %v71
  %146 = vmatpush.msra.mxu0 %v70
  %147 = vmatpush.msra.mxu0 %v69
  %148 = vmatpush.msra.mxu0 %v68
  %149 = vmatpush.msra.mxu0 %v67
  %150 = vmatpush.msra.mxu0 %v66
  %151 = vmatpush.msra.mxu0 %v65
  %152 = vmatpush.msra.mxu0 %v64
  %153 = vmatpush.msra.mxu0 %v63
  %154 = vmatpush.msra.mxu0 %v62
  %155 = vmatmul.f32.gmra.mxu0 1.0
  %v156 = vpop.f32.mrf.mxu0
  %v157 = vadd.f32 %v137, %v156
  %158 = vdwg.mxu0
  %v159 = vmul.f32 %v157, 0.001953125
  %v160 = vmul.f32 %v14, %v14
  %v161 = vmul.f32 %v15, %v15
  %v162 = vmul.f32 %v16, %v16
  %v163 = vmul.f32 %v17, %v17
  %v164 = vmul.f32 %v18, %v18
  %v165 = vmul.f32 %v19, %v19
  %v166 = vmul.f32 %v20, %v20
  %v167 = vmul.f32 %v21, %v21
  %v168 = vmul.f32 %v22, %v22
  %v169 = vmul.f32 %v23, %v23
  %v170 = vmul.f32 %v24, %v24
  %v171 = vmul.f32 %v25, %v25
  %v172 = vmul.f32 %v26, %v26
  %v173 = vmul.f32 %v27, %v27
  %v174 = vmul.f32 %v28, %v28
  %v175 = vmul.f32 %v29, %v29
  %v176 = vmul.f32 %v30, %v30
  %v177 = vmul.f32 %v31, %v31
  %v178 = vmul.f32 %v32, %v32
  %v179 = vmul.f32 %v33, %v33
  %v180 = vmul.f32 %v34, %v34
  %v181 = vmul.f32 %v35, %v35
  %v182 = vmul.f32 %v36, %v36
  %v183 = vmul.f32 %v37, %v37
  %v184 = vmul.f32 %v38, %v38
  %v185 = vmul.f32 %v39, %v39
  %v186 = vmul.f32 %v40, %v40
  %v187 = vmul.f32 %v41, %v41
  %v188 = vmul.f32 %v42, %v42
  %v189 = vmul.f32 %v43, %v43
  %v190 = vmul.f32 %v44, %v44
  %v191 = vmul.f32 %v45, %v45
  %v192 = vmul.f32 %v46, %v46
  %v193 = vmul.f32 %v47, %v47
  %v194 = vmul.f32 %v48, %v48
  %v195 = vmul.f32 %v49, %v49
  %v196 = vmul.f32 %v50, %v50
  %v197 = vmul.f32 %v51, %v51
  %v198 = vmul.f32 %v52, %v52
  %v199 = vmul.f32 %v53, %v53
  %v200 = vmul.f32 %v54, %v54
  %v201 = vmul.f32 %v55, %v55
  %v202 = vmul.f32 %v56, %v56
  %v203 = vmul.f32 %v57, %v57
  %v204 = vmul.f32 %v58, %v58
  %v205 = vmul.f32 %v59, %v59
  %v206 = vmul.f32 %v60, %v60
  %v207 = vmul.f32 %v61, %v61
  %v208 = vmul.f32 %v62, %v62
  %v209 = vmul.f32 %v63, %v63
  %v210 = vmul.f32 %v64, %v64
  %v211 = vmul.f32 %v65, %v65
  %v212 = vmul.f32 %v66, %v66
  %v213 = vmul.f32 %v67, %v67
  %v214 = vmul.f32 %v68, %v68
  %v215 = vmul.f32 %v69, %v69
  %v216 = vmul.f32 %v70, %v70
  %v217 = vmul.f32 %v71, %v71
  %v218 = vmul.f32 %v72, %v72
  %v219 = vmul.f32 %v73, %v73
  %v220 = vmul.f32 %v74, %v74
  %v221 = vmul.f32 %v75, %v75
  %v222 = vmul.f32 %v76, %v76
  %v223 = vmul.f32 %v77, %v77
  %224 = vmatpush.msra.mxu0 %v175
  %225 = vmatpush.msra.mxu0 %v174
  %226 = vmatpush.msra.mxu0 %v173
  %227 = vmatpush.msra.mxu0 %v172
  %228 = vmatpush.msra.mxu0 %v171
  %229 = vmatpush.msra.mxu0 %v170
  %230 = vmatpush.msra.mxu0 %v169
  %231 = vmatpush.msra.mxu0 %v168
  %232 = vmatpush.msra.mxu0 %v167
  %233 = vmatpush.msra.mxu0 %v166
  %234 = vmatpush.msra.mxu0 %v165
  %235 = vmatpush.msra.mxu0 %v164
  %236 = vmatpush.msra.mxu0 %v163
  %237 = vmatpush.msra.mxu0 %v162
  %238 = vmatpush.msra.mxu0 %v161
  %239 = vmatpush.msra.mxu0 %v160
  %240 = vmatmul.f32.gmra.mxu0 1.0
  %v241 = vpop.f32.mrf.mxu0
  %v242 = vadd.f32 0.0, %v241
  %243 = vdwg.mxu0
  %244 = vmatpush.msra.mxu0 %v191
  %245 = vmatpush.msra.mxu0 %v190
  %246 = vmatpush.msra.mxu0 %v189
  %247 = vmatpush.msra.mxu0 %v188
  %248 = vmatpush.msra.mxu0 %v187
  %249 = vmatpush.msra.mxu0 %v186
  %250 = vmatpush.msra.mxu0 %v185
  %251 = vmatpush.msra.mxu0 %v184
  %252 = vmatpush.msra.mxu0 %v183
  %253 = vmatpush.msra.mxu0 %v182
  %254 = vmatpush.msra.mxu0 %v181
  %255 = vmatpush.msra.mxu0 %v180
  %256 = vmatpush.msra.mxu0 %v179
  %257 = vmatpush.msra.mxu0 %v178
  %258 = vmatpush.msra.mxu0 %v177
  %259 = vmatpush.msra.mxu0 %v176
  %260 = vmatmul.f32.gmra.mxu0 1.0
  %v261 = vpop.f32.mrf.mxu0
  %v262 = vadd.f32 %v242, %v261
  %263 = vdwg.mxu0
  %264 = vmatpush.msra.mxu0 %v207
  %265 = vmatpush.msra.mxu0 %v206
  %266 = vmatpush.msra.mxu0 %v205
  %267 = vmatpush.msra.mxu0 %v204
  %268 = vmatpush.msra.mxu0 %v203
  %269 = vmatpush.msra.mxu0 %v202
  %270 = vmatpush.msra.mxu0 %v201
  %271 = vmatpush.msra.mxu0 %v200
  %272 = vmatpush.msra.mxu0 %v199
  %273 = vmatpush.msra.mxu0 %v198
  %274 = vmatpush.msra.mxu0 %v197
  %275 = vmatpush.msra.mxu0 %v196
  %276 = vmatpush.msra.mxu0 %v195
  %277 = vmatpush.msra.mxu0 %v194
  %278 = vmatpush.msra.mxu0 %v193
  %279 = vmatpush.msra.mxu0 %v192
  %280 = vmatmul.f32.gmra.mxu0 1.0
  %v281 = vpop.f32.mrf.mxu0
  %v282 = vadd.f32 %v262, %v281
  %283 = vdwg.mxu0
  %284 = vmatpush.msra.mxu0 %v223
  %285 = vmatpush.msra.mxu0 %v222
  %286 = vmatpush.msra.mxu0 %v221
  %287 = vmatpush.msra.mxu0 %v220
  %288 = vmatpush.msra.mxu0 %v219
  %289 = vmatpush.msra.mxu0 %v218
  %290 = vmatpush.msra.mxu0 %v217
  %291 = vmatpush.msra.mxu0 %v216
  %292 = vmatpush.msra.mxu0 %v215
  %293 = vmatpush.msra.mxu0 %v214
  %294 = vmatpush.msra.mxu0 %v213
  %295 = vmatpush.msra.mxu0 %v212
  %296 = vmatpush.msra.mxu0 %v211
  %297 = vmatpush.msra.mxu0 %v210
  %298 = vmatpush.msra.mxu0 %v209
  %299 = vmatpush.msra.mxu0 %v208
  %300 = vmatmul.f32.gmra.mxu0 1.0
  %v301 = vpop.f32.mrf.mxu0
  %v302 = vadd.f32 %v282, %v301
  %303 = vdwg.mxu0
  %v304 = vmul.f32 %v302, 0.001953125
  %v305 = vmul.f32 %v159, %v159
  %v306 = vsub.f32 %v304, %v305
  %v307 = vmax.f32 %v306, 0.0
  %v308 = vadd.f32 %v307, 1e-05
  %v309 = vrsqrt.pop %v308
  %v310 = vmul.f32 %v309, %v308
  %v311 = vmul.f32 %v310, %v309
  %v312 = vmul.f32 0.5, %v311
  %v313 = vsub.f32 1.5, %v312
  %v314 = vmul.f32 %v309, %v313
  %vm315 = vweird.f32 %v308
  %vm316 = vweird.f32 %v309
  %vm317 = vmor %vm315, %vm316
  %v318 = vsel %vm317, %v309, %v314
  %v319 = vmul.f32 %v78, %v318
  %v320 = vlaneseq
  %v321 = vshrl.u32 %v320, 7
  %v322 = vadd.s32 %v321, 8
  %v323 = vadd.s32 %v321, 16
  %v324 = vlaneseq
  %v325 = vand.u32 %v324, 127
  %vm326 = vcmp.eq.s32.totalorder %v321, %v325
  %vm327 = vcmp.eq.s32.totalorder %v322, %v325
  %vm328 = vcmp.eq.s32.totalorder %v323, %v325
  %v329 = vperm.slane %v319, 0
  %v330 = vsel %vm326, %v329, 0.0
  %v331 = vsel %vm327, %v329, 0.0
  %v332 = vsel %vm328, %v329, 0.0
  %v333 = vld [vmem:[%s2] sm:$0xff]
  %v334 = vld [vmem:[%s2 + $0x8] sm:$0xff]
  %v335 = vld [vmem:[%s2 + $0x10] sm:$0xff]
  %vm336 = vcmask 195584
  %v338 = vsel %vm336, %v330, 0
  %v341 = vsel %vm336, %v331, 0
  %v344 = vsel %vm336, %v332, 0
  %346 = vmatpush.msra.mxu0 0.0
  %347 = vmatpush.msra.mxu0 0.0
  %348 = vmatpush.msra.mxu0 0.0
  %349 = vmatpush.msra.mxu0 0.0
  %350 = vmatpush.msra.mxu0 0.0
  %351 = vmatpush.msra.mxu0 0.0
  %352 = vmatpush.msra.mxu0 0.0
  %353 = vmatpush.msra.mxu0 0.0
  %354 = vmatpush.msra.mxu0 0.0
  %355 = vmatpush.msra.mxu0 0.0
  %356 = vmatpush.msra.mxu0 0.0
  %357 = vmatpush.msra.mxu0 0.0
  %358 = vmatpush.msra.mxu0 0.0
  %359 = vmatpush.msra.mxu0 %v335
  %360 = vmatpush.msra.mxu0 %v334
  %361 = vmatpush.msra.mxu0 %v333
  %362 = vmatmul.f32.gmra.mxu0 %v338
  %v363 = vpop.f32.mrf.mxu0
  %v364 = vadd.f32 0.0, %v363
  %365 = vmatmul.f32.gmra.mxu0 %v341
  %v366 = vpop.f32.mrf.mxu0
  %v367 = vadd.f32 0.0, %v366
  %368 = vmatmul.f32.gmra.mxu0 %v344
  %v369 = vpop.f32.mrf.mxu0
  %v370 = vadd.f32 0.0, %v369
  %371 = vdwg.mxu0
  %v373 = vsel %vm336, %v14, 0
  %v376 = vsel %vm336, %v15, 0
  %v379 = vsel %vm336, %v16, 0
  %v382 = vsel %vm336, %v17, 0
  %v385 = vsel %vm336, %v18, 0
  %v388 = vsel %vm336, %v19, 0
  %v391 = vsel %vm336, %v20, 0
  %v394 = vsel %vm336, %v21, 0
  %v397 = vsel %vm336, %v22, 0
  %v400 = vsel %vm336, %v23, 0
  %v403 = vsel %vm336, %v24, 0
  %v406 = vsel %vm336, %v25, 0
  %v409 = vsel %vm336, %v26, 0
  %v412 = vsel %vm336, %v27, 0
  %v415 = vsel %vm336, %v28, 0
  %v418 = vsel %vm336, %v29, 0
  %v421 = vsel %vm336, %v30, 0
  %v424 = vsel %vm336, %v31, 0
  %v427 = vsel %vm336, %v32, 0
  %v430 = vsel %vm336, %v33, 0
  %v433 = vsel %vm336, %v34, 0
  %v436 = vsel %vm336, %v35, 0
  %v439 = vsel %vm336, %v36, 0
  %v442 = vsel %vm336, %v37, 0
  %v445 = vsel %vm336, %v38, 0
  %v448 = vsel %vm336, %v39, 0
  %v451 = vsel %vm336, %v40, 0
  %v454 = vsel %vm336, %v41, 0
  %v457 = vsel %vm336, %v42, 0
  %v460 = vsel %vm336, %v43, 0
  %v463 = vsel %vm336, %v44, 0
  %v466 = vsel %vm336, %v45, 0
  %v469 = vsel %vm336, %v46, 0
  %v472 = vsel %vm336, %v47, 0
  %v475 = vsel %vm336, %v48, 0
  %v478 = vsel %vm336, %v49, 0
  %v481 = vsel %vm336, %v50, 0
  %v484 = vsel %vm336, %v51, 0
  %v487 = vsel %vm336, %v52, 0
  %v490 = vsel %vm336, %v53, 0
  %v493 = vsel %vm336, %v54, 0
  %v496 = vsel %vm336, %v55, 0
  %v499 = vsel %vm336, %v56, 0
  %v502 = vsel %vm336, %v57, 0
  %v505 = vsel %vm336, %v58, 0
  %v508 = vsel %vm336, %v59, 0
  %v511 = vsel %vm336, %v60, 0
  %v514 = vsel %vm336, %v61, 0
  %v517 = vsel %vm336, %v62, 0
  %v520 = vsel %vm336, %v63, 0
  %v523 = vsel %vm336, %v64, 0
  %v526 = vsel %vm336, %v65, 0
  %v529 = vsel %vm336, %v66, 0
  %v532 = vsel %vm336, %v67, 0
  %v535 = vsel %vm336, %v68, 0
  %v538 = vsel %vm336, %v69, 0
  %v541 = vsel %vm336, %v70, 0
  %v544 = vsel %vm336, %v71, 0
  %v547 = vsel %vm336, %v72, 0
  %v550 = vsel %vm336, %v73, 0
  %v553 = vsel %vm336, %v74, 0
  %v556 = vsel %vm336, %v75, 0
  %v559 = vsel %vm336, %v76, 0
  %v562 = vsel %vm336, %v77, 0
  %564 = vmatpush.msra.mxu0 0.0
  %565 = vmatpush.msra.mxu0 0.0
  %566 = vmatpush.msra.mxu0 0.0
  %567 = vmatpush.msra.mxu0 0.0
  %568 = vmatpush.msra.mxu0 0.0
  %569 = vmatpush.msra.mxu0 0.0
  %570 = vmatpush.msra.mxu0 0.0
  %571 = vmatpush.msra.mxu0 0.0
  %572 = vmatpush.msra.mxu0 0.0
  %573 = vmatpush.msra.mxu0 0.0
  %574 = vmatpush.msra.mxu0 0.0
  %575 = vmatpush.msra.mxu0 0.0
  %576 = vmatpush.msra.mxu0 0.0
  %577 = vmatpush.msra.mxu0 %v370
  %578 = vmatpush.msra.mxu0 %v367
  %579 = vmatpush.msra.mxu0 %v364
  %580 = vmatmul.f32.gmra.mxu0 %v373
  %v581 = vpop.f32.mrf.mxu0
  %v582 = vadd.f32 0.0, %v581
  %583 = vmatmul.f32.gmra.mxu0 %v376
  %v584 = vpop.f32.mrf.mxu0
  %v585 = vadd.f32 0.0, %v584
  %586 = vmatmul.f32.gmra.mxu0 %v379
  %v587 = vpop.f32.mrf.mxu0
  %v588 = vadd.f32 0.0, %v587
  %589 = vmatmul.f32.gmra.mxu0 %v382
  %v590 = vpop.f32.mrf.mxu0
  %v591 = vadd.f32 0.0, %v590
  %592 = vmatmul.f32.gmra.mxu0 %v385
  %v593 = vpop.f32.mrf.mxu0
  %v594 = vadd.f32 0.0, %v593
  %595 = vmatmul.f32.gmra.mxu0 %v388
  %v596 = vpop.f32.mrf.mxu0
  %v597 = vadd.f32 0.0, %v596
  %598 = vmatmul.f32.gmra.mxu0 %v391
  %v599 = vpop.f32.mrf.mxu0
  %v600 = vadd.f32 0.0, %v599
  %601 = vmatmul.f32.gmra.mxu0 %v394
  %v602 = vpop.f32.mrf.mxu0
  %v603 = vadd.f32 0.0, %v602
  %604 = vmatmul.f32.gmra.mxu0 %v397
  %v605 = vpop.f32.mrf.mxu0
  %v606 = vadd.f32 0.0, %v605
  %607 = vmatmul.f32.gmra.mxu0 %v400
  %v608 = vpop.f32.mrf.mxu0
  %v609 = vadd.f32 0.0, %v608
  %610 = vmatmul.f32.gmra.mxu0 %v403
  %v611 = vpop.f32.mrf.mxu0
  %v612 = vadd.f32 0.0, %v611
  %613 = vmatmul.f32.gmra.mxu0 %v406
  %v614 = vpop.f32.mrf.mxu0
  %v615 = vadd.f32 0.0, %v614
  %616 = vmatmul.f32.gmra.mxu0 %v409
  %v617 = vpop.f32.mrf.mxu0
  %v618 = vadd.f32 0.0, %v617
  %619 = vmatmul.f32.gmra.mxu0 %v412
  %v620 = vpop.f32.mrf.mxu0
  %v621 = vadd.f32 0.0, %v620
  %622 = vmatmul.f32.gmra.mxu0 %v415
  %v623 = vpop.f32.mrf.mxu0
  %v624 = vadd.f32 0.0, %v623
  %625 = vmatmul.f32.gmra.mxu0 %v418
  %v626 = vpop.f32.mrf.mxu0
  %v627 = vadd.f32 0.0, %v626
  %628 = vmatmul.f32.gmra.mxu0 %v421
  %v629 = vpop.f32.mrf.mxu0
  %v630 = vadd.f32 0.0, %v629
  %631 = vmatmul.f32.gmra.mxu0 %v424
  %v632 = vpop.f32.mrf.mxu0
  %v633 = vadd.f32 0.0, %v632
  %634 = vmatmul.f32.gmra.mxu0 %v427
  %v635 = vpop.f32.mrf.mxu0
  %v636 = vadd.f32 0.0, %v635
  %637 = vmatmul.f32.gmra.mxu0 %v430
  %v638 = vpop.f32.mrf.mxu0
  %v639 = vadd.f32 0.0, %v638
  %640 = vmatmul.f32.gmra.mxu0 %v433
  %v641 = vpop.f32.mrf.mxu0
  %v642 = vadd.f32 0.0, %v641
  %643 = vmatmul.f32.gmra.mxu0 %v436
  %v644 = vpop.f32.mrf.mxu0
  %v645 = vadd.f32 0.0, %v644
  %646 = vmatmul.f32.gmra.mxu0 %v439
  %v647 = vpop.f32.mrf.mxu0
  %v648 = vadd.f32 0.0, %v647
  %649 = vmatmul.f32.gmra.mxu0 %v442
  %v650 = vpop.f32.mrf.mxu0
  %v651 = vadd.f32 0.0, %v650
  %652 = vmatmul.f32.gmra.mxu0 %v445
  %v653 = vpop.f32.mrf.mxu0
  %v654 = vadd.f32 0.0, %v653
  %655 = vmatmul.f32.gmra.mxu0 %v448
  %v656 = vpop.f32.mrf.mxu0
  %v657 = vadd.f32 0.0, %v656
  %658 = vmatmul.f32.gmra.mxu0 %v451
  %v659 = vpop.f32.mrf.mxu0
  %v660 = vadd.f32 0.0, %v659
  %661 = vmatmul.f32.gmra.mxu0 %v454
  %v662 = vpop.f32.mrf.mxu0
  %v663 = vadd.f32 0.0, %v662
  %664 = vmatmul.f32.gmra.mxu0 %v457
  %v665 = vpop.f32.mrf.mxu0
  %v666 = vadd.f32 0.0, %v665
  %667 = vmatmul.f32.gmra.mxu0 %v460
  %v668 = vpop.f32.mrf.mxu0
  %v669 = vadd.f32 0.0, %v668
  %670 = vmatmul.f32.gmra.mxu0 %v463
  %v671 = vpop.f32.mrf.mxu0
  %v672 = vadd.f32 0.0, %v671
  %673 = vmatmul.f32.gmra.mxu0 %v466
  %v674 = vpop.f32.mrf.mxu0
  %v675 = vadd.f32 0.0, %v674
  %676 = vmatmul.f32.gmra.mxu0 %v469
  %v677 = vpop.f32.mrf.mxu0
  %v678 = vadd.f32 0.0, %v677
  %679 = vmatmul.f32.gmra.mxu0 %v472
  %v680 = vpop.f32.mrf.mxu0
  %v681 = vadd.f32 0.0, %v680
  %682 = vmatmul.f32.gmra.mxu0 %v475
  %v683 = vpop.f32.mrf.mxu0
  %v684 = vadd.f32 0.0, %v683
  %685 = vmatmul.f32.gmra.mxu0 %v478
  %v686 = vpop.f32.mrf.mxu0
  %v687 = vadd.f32 0.0, %v686
  %688 = vmatmul.f32.gmra.mxu0 %v481
  %v689 = vpop.f32.mrf.mxu0
  %v690 = vadd.f32 0.0, %v689
  %691 = vmatmul.f32.gmra.mxu0 %v484
  %v692 = vpop.f32.mrf.mxu0
  %v693 = vadd.f32 0.0, %v692
  %694 = vmatmul.f32.gmra.mxu0 %v487
  %v695 = vpop.f32.mrf.mxu0
  %v696 = vadd.f32 0.0, %v695
  %697 = vmatmul.f32.gmra.mxu0 %v490
  %v698 = vpop.f32.mrf.mxu0
  %v699 = vadd.f32 0.0, %v698
  %700 = vmatmul.f32.gmra.mxu0 %v493
  %v701 = vpop.f32.mrf.mxu0
  %v702 = vadd.f32 0.0, %v701
  %703 = vmatmul.f32.gmra.mxu0 %v496
  %v704 = vpop.f32.mrf.mxu0
  %v705 = vadd.f32 0.0, %v704
  %706 = vmatmul.f32.gmra.mxu0 %v499
  %v707 = vpop.f32.mrf.mxu0
  %v708 = vadd.f32 0.0, %v707
  %709 = vmatmul.f32.gmra.mxu0 %v502
  %v710 = vpop.f32.mrf.mxu0
  %v711 = vadd.f32 0.0, %v710
  %712 = vmatmul.f32.gmra.mxu0 %v505
  %v713 = vpop.f32.mrf.mxu0
  %v714 = vadd.f32 0.0, %v713
  %715 = vmatmul.f32.gmra.mxu0 %v508
  %v716 = vpop.f32.mrf.mxu0
  %v717 = vadd.f32 0.0, %v716
  %718 = vmatmul.f32.gmra.mxu0 %v511
  %v719 = vpop.f32.mrf.mxu0
  %v720 = vadd.f32 0.0, %v719
  %721 = vmatmul.f32.gmra.mxu0 %v514
  %v722 = vpop.f32.mrf.mxu0
  %v723 = vadd.f32 0.0, %v722
  %724 = vmatmul.f32.gmra.mxu0 %v517
  %v725 = vpop.f32.mrf.mxu0
  %v726 = vadd.f32 0.0, %v725
  %727 = vmatmul.f32.gmra.mxu0 %v520
  %v728 = vpop.f32.mrf.mxu0
  %v729 = vadd.f32 0.0, %v728
  %730 = vmatmul.f32.gmra.mxu0 %v523
  %v731 = vpop.f32.mrf.mxu0
  %v732 = vadd.f32 0.0, %v731
  %733 = vmatmul.f32.gmra.mxu0 %v526
  %v734 = vpop.f32.mrf.mxu0
  %v735 = vadd.f32 0.0, %v734
  %736 = vmatmul.f32.gmra.mxu0 %v529
  %v737 = vpop.f32.mrf.mxu0
  %v738 = vadd.f32 0.0, %v737
  %739 = vmatmul.f32.gmra.mxu0 %v532
  %v740 = vpop.f32.mrf.mxu0
  %v741 = vadd.f32 0.0, %v740
  %742 = vmatmul.f32.gmra.mxu0 %v535
  %v743 = vpop.f32.mrf.mxu0
  %v744 = vadd.f32 0.0, %v743
  %745 = vmatmul.f32.gmra.mxu0 %v538
  %v746 = vpop.f32.mrf.mxu0
  %v747 = vadd.f32 0.0, %v746
  %748 = vmatmul.f32.gmra.mxu0 %v541
  %v749 = vpop.f32.mrf.mxu0
  %v750 = vadd.f32 0.0, %v749
  %751 = vmatmul.f32.gmra.mxu0 %v544
  %v752 = vpop.f32.mrf.mxu0
  %v753 = vadd.f32 0.0, %v752
  %754 = vmatmul.f32.gmra.mxu0 %v547
  %v755 = vpop.f32.mrf.mxu0
  %v756 = vadd.f32 0.0, %v755
  %757 = vmatmul.f32.gmra.mxu0 %v550
  %v758 = vpop.f32.mrf.mxu0
  %v759 = vadd.f32 0.0, %v758
  %760 = vmatmul.f32.gmra.mxu0 %v553
  %v761 = vpop.f32.mrf.mxu0
  %v762 = vadd.f32 0.0, %v761
  %763 = vmatmul.f32.gmra.mxu0 %v556
  %v764 = vpop.f32.mrf.mxu0
  %v765 = vadd.f32 0.0, %v764
  %766 = vmatmul.f32.gmra.mxu0 %v559
  %v767 = vpop.f32.mrf.mxu0
  %v768 = vadd.f32 0.0, %v767
  %769 = vmatmul.f32.gmra.mxu0 %v562
  %v770 = vpop.f32.mrf.mxu0
  %v771 = vadd.f32 0.0, %v770
  %772 = vdwg.mxu0
  %773 = vmatpush.msra.mxu0 %v627
  %774 = vmatpush.msra.mxu0 %v624
  %775 = vmatpush.msra.mxu0 %v621
  %776 = vmatpush.msra.mxu0 %v618
  %777 = vmatpush.msra.mxu0 %v615
  %778 = vmatpush.msra.mxu0 %v612
  %779 = vmatpush.msra.mxu0 %v609
  %780 = vmatpush.msra.mxu0 %v606
  %781 = vmatpush.msra.mxu0 %v603
  %782 = vmatpush.msra.mxu0 %v600
  %783 = vmatpush.msra.mxu0 %v597
  %784 = vmatpush.msra.mxu0 %v594
  %785 = vmatpush.msra.mxu0 %v591
  %786 = vmatpush.msra.mxu0 %v588
  %787 = vmatpush.msra.mxu0 %v585
  %788 = vmatpush.msra.mxu0 %v582
  %789 = vmatmul.f32.gmra.mxu0 1.0
  %v790 = vpop.f32.mrf.mxu0
  %v791 = vadd.f32 0.0, %v790
  %792 = vdwg.mxu0
  %793 = vmatpush.msra.mxu0 %v675
  %794 = vmatpush.msra.mxu0 %v672
  %795 = vmatpush.msra.mxu0 %v669
  %796 = vmatpush.msra.mxu0 %v666
  %797 = vmatpush.msra.mxu0 %v663
  %798 = vmatpush.msra.mxu0 %v660
  %799 = vmatpush.msra.mxu0 %v657
  %800 = vmatpush.msra.mxu0 %v654
  %801 = vmatpush.msra.mxu0 %v651
  %802 = vmatpush.msra.mxu0 %v648
  %803 = vmatpush.msra.mxu0 %v645
  %804 = vmatpush.msra.mxu0 %v642
  %805 = vmatpush.msra.mxu0 %v639
  %806 = vmatpush.msra.mxu0 %v636
  %807 = vmatpush.msra.mxu0 %v633
  %808 = vmatpush.msra.mxu0 %v630
  %809 = vmatmul.f32.gmra.mxu0 1.0
  %v810 = vpop.f32.mrf.mxu0
  %v811 = vadd.f32 %v791, %v810
  %812 = vdwg.mxu0
  %813 = vmatpush.msra.mxu0 %v723
  %814 = vmatpush.msra.mxu0 %v720
  %815 = vmatpush.msra.mxu0 %v717
  %816 = vmatpush.msra.mxu0 %v714
  %817 = vmatpush.msra.mxu0 %v711
  %818 = vmatpush.msra.mxu0 %v708
  %819 = vmatpush.msra.mxu0 %v705
  %820 = vmatpush.msra.mxu0 %v702
  %821 = vmatpush.msra.mxu0 %v699
  %822 = vmatpush.msra.mxu0 %v696
  %823 = vmatpush.msra.mxu0 %v693
  %824 = vmatpush.msra.mxu0 %v690
  %825 = vmatpush.msra.mxu0 %v687
  %826 = vmatpush.msra.mxu0 %v684
  %827 = vmatpush.msra.mxu0 %v681
  %828 = vmatpush.msra.mxu0 %v678
  %829 = vmatmul.f32.gmra.mxu0 1.0
  %v830 = vpop.f32.mrf.mxu0
  %v831 = vadd.f32 %v811, %v830
  %832 = vdwg.mxu0
  %833 = vmatpush.msra.mxu0 %v771
  %834 = vmatpush.msra.mxu0 %v768
  %835 = vmatpush.msra.mxu0 %v765
  %836 = vmatpush.msra.mxu0 %v762
  %837 = vmatpush.msra.mxu0 %v759
  %838 = vmatpush.msra.mxu0 %v756
  %839 = vmatpush.msra.mxu0 %v753
  %840 = vmatpush.msra.mxu0 %v750
  %841 = vmatpush.msra.mxu0 %v747
  %842 = vmatpush.msra.mxu0 %v744
  %843 = vmatpush.msra.mxu0 %v741
  %844 = vmatpush.msra.mxu0 %v738
  %845 = vmatpush.msra.mxu0 %v735
  %846 = vmatpush.msra.mxu0 %v732
  %847 = vmatpush.msra.mxu0 %v729
  %848 = vmatpush.msra.mxu0 %v726
  %849 = vmatmul.f32.gmra.mxu0 1.0
  %v850 = vpop.f32.mrf.mxu0
  %v851 = vadd.f32 %v831, %v850
  %852 = vdwg.mxu0
  %v853 = vmul.f32 %v851, 0.001953125
  %v854 = vmul.f32 %v582, %v582
  %v855 = vmul.f32 %v585, %v585
  %v856 = vmul.f32 %v588, %v588
  %v857 = vmul.f32 %v591, %v591
  %v858 = vmul.f32 %v594, %v594
  %v859 = vmul.f32 %v597, %v597
  %v860 = vmul.f32 %v600, %v600
  %v861 = vmul.f32 %v603, %v603
  %v862 = vmul.f32 %v606, %v606
  %v863 = vmul.f32 %v609, %v609
  %v864 = vmul.f32 %v612, %v612
  %v865 = vmul.f32 %v615, %v615
  %v866 = vmul.f32 %v618, %v618
  %v867 = vmul.f32 %v621, %v621
  %v868 = vmul.f32 %v624, %v624
  %v869 = vmul.f32 %v627, %v627
  %v870 = vmul.f32 %v630, %v630
  %v871 = vmul.f32 %v633, %v633
  %v872 = vmul.f32 %v636, %v636
  %v873 = vmul.f32 %v639, %v639
  %v874 = vmul.f32 %v642, %v642
  %v875 = vmul.f32 %v645, %v645
  %v876 = vmul.f32 %v648, %v648
  %v877 = vmul.f32 %v651, %v651
  %v878 = vmul.f32 %v654, %v654
  %v879 = vmul.f32 %v657, %v657
  %v880 = vmul.f32 %v660, %v660
  %v881 = vmul.f32 %v663, %v663
  %v882 = vmul.f32 %v666, %v666
  %v883 = vmul.f32 %v669, %v669
  %v884 = vmul.f32 %v672, %v672
  %v885 = vmul.f32 %v675, %v675
  %v886 = vmul.f32 %v678, %v678
  %v887 = vmul.f32 %v681, %v681
  %v888 = vmul.f32 %v684, %v684
  %v889 = vmul.f32 %v687, %v687
  %v890 = vmul.f32 %v690, %v690
  %v891 = vmul.f32 %v693, %v693
  %v892 = vmul.f32 %v696, %v696
  %v893 = vmul.f32 %v699, %v699
  %v894 = vmul.f32 %v702, %v702
  %v895 = vmul.f32 %v705, %v705
  %v896 = vmul.f32 %v708, %v708
  %v897 = vmul.f32 %v711, %v711
  %v898 = vmul.f32 %v714, %v714
  %v899 = vmul.f32 %v717, %v717
  %v900 = vmul.f32 %v720, %v720
  %v901 = vmul.f32 %v723, %v723
  %v902 = vmul.f32 %v726, %v726
  %v903 = vmul.f32 %v729, %v729
  %v904 = vmul.f32 %v732, %v732
  %v905 = vmul.f32 %v735, %v735
  %v906 = vmul.f32 %v738, %v738
  %v907 = vmul.f32 %v741, %v741
  %v908 = vmul.f32 %v744, %v744
  %v909 = vmul.f32 %v747, %v747
  %v910 = vmul.f32 %v750, %v750
  %v911 = vmul.f32 %v753, %v753
  %v912 = vmul.f32 %v756, %v756
  %v913 = vmul.f32 %v759, %v759
  %v914 = vmul.f32 %v762, %v762
  %v915 = vmul.f32 %v765, %v765
  %v916 = vmul.f32 %v768, %v768
  %v917 = vmul.f32 %v771, %v771
  %918 = vmatpush.msra.mxu0 %v869
  %919 = vmatpush.msra.mxu0 %v868
  %920 = vmatpush.msra.mxu0 %v867
  %921 = vmatpush.msra.mxu0 %v866
  %922 = vmatpush.msra.mxu0 %v865
  %923 = vmatpush.msra.mxu0 %v864
  %924 = vmatpush.msra.mxu0 %v863
  %925 = vmatpush.msra.mxu0 %v862
  %926 = vmatpush.msra.mxu0 %v861
  %927 = vmatpush.msra.mxu0 %v860
  %928 = vmatpush.msra.mxu0 %v859
  %929 = vmatpush.msra.mxu0 %v858
  %930 = vmatpush.msra.mxu0 %v857
  %931 = vmatpush.msra.mxu0 %v856
  %932 = vmatpush.msra.mxu0 %v855
  %933 = vmatpush.msra.mxu0 %v854
  %934 = vmatmul.f32.gmra.mxu0 1.0
  %v935 = vpop.f32.mrf.mxu0
  %v936 = vadd.f32 0.0, %v935
  %937 = vdwg.mxu0
  %938 = vmatpush.msra.mxu0 %v885
  %939 = vmatpush.msra.mxu0 %v884
  %940 = vmatpush.msra.mxu0 %v883
  %941 = vmatpush.msra.mxu0 %v882
  %942 = vmatpush.msra.mxu0 %v881
  %943 = vmatpush.msra.mxu0 %v880
  %944 = vmatpush.msra.mxu0 %v879
  %945 = vmatpush.msra.mxu0 %v878
  %946 = vmatpush.msra.mxu0 %v877
  %947 = vmatpush.msra.mxu0 %v876
  %948 = vmatpush.msra.mxu0 %v875
  %949 = vmatpush.msra.mxu0 %v874
  %950 = vmatpush.msra.mxu0 %v873
  %951 = vmatpush.msra.mxu0 %v872
  %952 = vmatpush.msra.mxu0 %v871
  %953 = vmatpush.msra.mxu0 %v870
  %954 = vmatmul.f32.gmra.mxu0 1.0
  %v955 = vpop.f32.mrf.mxu0
  %v956 = vadd.f32 %v936, %v955
  %957 = vdwg.mxu0
  %958 = vmatpush.msra.mxu0 %v901
  %959 = vmatpush.msra.mxu0 %v900
  %960 = vmatpush.msra.mxu0 %v899
  %961 = vmatpush.msra.mxu0 %v898
  %962 = vmatpush.msra.mxu0 %v897
  %963 = vmatpush.msra.mxu0 %v896
  %964 = vmatpush.msra.mxu0 %v895
  %965 = vmatpush.msra.mxu0 %v894
  %966 = vmatpush.msra.mxu0 %v893
  %967 = vmatpush.msra.mxu0 %v892
  %968 = vmatpush.msra.mxu0 %v891
  %969 = vmatpush.msra.mxu0 %v890
  %970 = vmatpush.msra.mxu0 %v889
  %971 = vmatpush.msra.mxu0 %v888
  %972 = vmatpush.msra.mxu0 %v887
  %973 = vmatpush.msra.mxu0 %v886
  %974 = vmatmul.f32.gmra.mxu0 1.0
  %v975 = vpop.f32.mrf.mxu0
  %v976 = vadd.f32 %v956, %v975
  %977 = vdwg.mxu0
  %978 = vmatpush.msra.mxu0 %v917
  %979 = vmatpush.msra.mxu0 %v916
  %980 = vmatpush.msra.mxu0 %v915
  %981 = vmatpush.msra.mxu0 %v914
  %982 = vmatpush.msra.mxu0 %v913
  %983 = vmatpush.msra.mxu0 %v912
  %984 = vmatpush.msra.mxu0 %v911
  %985 = vmatpush.msra.mxu0 %v910
  %986 = vmatpush.msra.mxu0 %v909
  %987 = vmatpush.msra.mxu0 %v908
  %988 = vmatpush.msra.mxu0 %v907
  %989 = vmatpush.msra.mxu0 %v906
  %990 = vmatpush.msra.mxu0 %v905
  %991 = vmatpush.msra.mxu0 %v904
  %992 = vmatpush.msra.mxu0 %v903
  %993 = vmatpush.msra.mxu0 %v902
  %994 = vmatmul.f32.gmra.mxu0 1.0
  %v995 = vpop.f32.mrf.mxu0
  %v996 = vadd.f32 %v976, %v995
  %997 = vdwg.mxu0
  %v998 = vmul.f32 %v996, 0.001953125
  %v999 = vmul.f32 %v853, %v853
  %v1000 = vsub.f32 %v998, %v999
  %v1001 = vmax.f32 %v1000, 0.0
  %v1002 = vadd.f32 %v1001, 1e-05
  %v1003 = vrsqrt.pop %v1002
  %v1004 = vmul.f32 %v1003, %v1002
  %v1005 = vmul.f32 %v1004, %v1003
  %v1006 = vmul.f32 0.5, %v1005
  %v1007 = vsub.f32 1.5, %v1006
  %v1008 = vmul.f32 %v1003, %v1007
  %vm1009 = vweird.f32 %v1002
  %vm1010 = vweird.f32 %v1003
  %vm1011 = vmor %vm1009, %vm1010
  %v1012 = vsel %vm1011, %v1003, %v1008
  %v1014 = vrot.slane %v1012, 6
  %v1016 = vmul.f32 %v78, %v1014
  %v1018 = vrot.slane %v1016, 2
  %v1020 = vmul.f32 %v853, %v1018
  %v1022 = vrot.slane %v1020, 5
  %v1024 = vsub.f32 %v78, %v1022
  %v1025 = vperm.slane %v1016, 2
  %v1026 = vmul.f32 %v582, %v1025
  %v1027 = vmul.f32 %v585, %v1025
  %v1028 = vmul.f32 %v588, %v1025
  %v1029 = vmul.f32 %v591, %v1025
  %v1030 = vmul.f32 %v594, %v1025
  %v1031 = vmul.f32 %v597, %v1025
  %v1032 = vmul.f32 %v600, %v1025
  %v1033 = vmul.f32 %v603, %v1025
  %v1034 = vmul.f32 %v606, %v1025
  %v1035 = vmul.f32 %v609, %v1025
  %v1036 = vmul.f32 %v612, %v1025
  %v1037 = vmul.f32 %v615, %v1025
  %v1038 = vmul.f32 %v618, %v1025
  %v1039 = vmul.f32 %v621, %v1025
  %v1040 = vmul.f32 %v624, %v1025
  %v1041 = vmul.f32 %v627, %v1025
  %v1042 = vmul.f32 %v630, %v1025
  %v1043 = vmul.f32 %v633, %v1025
  %v1044 = vmul.f32 %v636, %v1025
  %v1045 = vmul.f32 %v639, %v1025
  %v1046 = vmul.f32 %v642, %v1025
  %v1047 = vmul.f32 %v645, %v1025
  %v1048 = vmul.f32 %v648, %v1025
  %v1049 = vmul.f32 %v651, %v1025
  %v1050 = vmul.f32 %v654, %v1025
  %v1051 = vmul.f32 %v657, %v1025
  %v1052 = vmul.f32 %v660, %v1025
  %v1053 = vmul.f32 %v663, %v1025
  %v1054 = vmul.f32 %v666, %v1025
  %v1055 = vmul.f32 %v669, %v1025
  %v1056 = vmul.f32 %v672, %v1025
  %v1057 = vmul.f32 %v675, %v1025
  %v1058 = vmul.f32 %v678, %v1025
  %v1059 = vmul.f32 %v681, %v1025
  %v1060 = vmul.f32 %v684, %v1025
  %v1061 = vmul.f32 %v687, %v1025
  %v1062 = vmul.f32 %v690, %v1025
  %v1063 = vmul.f32 %v693, %v1025
  %v1064 = vmul.f32 %v696, %v1025
  %v1065 = vmul.f32 %v699, %v1025
  %v1066 = vmul.f32 %v702, %v1025
  %v1067 = vmul.f32 %v705, %v1025
  %v1068 = vmul.f32 %v708, %v1025
  %v1069 = vmul.f32 %v711, %v1025
  %v1070 = vmul.f32 %v714, %v1025
  %v1071 = vmul.f32 %v717, %v1025
  %v1072 = vmul.f32 %v720, %v1025
  %v1073 = vmul.f32 %v723, %v1025
  %v1074 = vmul.f32 %v726, %v1025
  %v1075 = vmul.f32 %v729, %v1025
  %v1076 = vmul.f32 %v732, %v1025
  %v1077 = vmul.f32 %v735, %v1025
  %v1078 = vmul.f32 %v738, %v1025
  %v1079 = vmul.f32 %v741, %v1025
  %v1080 = vmul.f32 %v744, %v1025
  %v1081 = vmul.f32 %v747, %v1025
  %v1082 = vmul.f32 %v750, %v1025
  %v1083 = vmul.f32 %v753, %v1025
  %v1084 = vmul.f32 %v756, %v1025
  %v1085 = vmul.f32 %v759, %v1025
  %v1086 = vmul.f32 %v762, %v1025
  %v1087 = vmul.f32 %v765, %v1025
  %v1088 = vmul.f32 %v768, %v1025
  %v1089 = vmul.f32 %v771, %v1025
  %v1090 = vperm.slane %v1024, 3
  %v1091 = vadd.f32 %v1026, %v1090
  %v1092 = vadd.f32 %v1027, %v1090
  %v1093 = vadd.f32 %v1028, %v1090
  %v1094 = vadd.f32 %v1029, %v1090
  %v1095 = vadd.f32 %v1030, %v1090
  %v1096 = vadd.f32 %v1031, %v1090
  %v1097 = vadd.f32 %v1032, %v1090
  %v1098 = vadd.f32 %v1033, %v1090
  %v1099 = vadd.f32 %v1034, %v1090
  %v1100 = vadd.f32 %v1035, %v1090
  %v1101 = vadd.f32 %v1036, %v1090
  %v1102 = vadd.f32 %v1037, %v1090
  %v1103 = vadd.f32 %v1038, %v1090
  %v1104 = vadd.f32 %v1039, %v1090
  %v1105 = vadd.f32 %v1040, %v1090
  %v1106 = vadd.f32 %v1041, %v1090
  %v1107 = vadd.f32 %v1042, %v1090
  %v1108 = vadd.f32 %v1043, %v1090
  %v1109 = vadd.f32 %v1044, %v1090
  %v1110 = vadd.f32 %v1045, %v1090
  %v1111 = vadd.f32 %v1046, %v1090
  %v1112 = vadd.f32 %v1047, %v1090
  %v1113 = vadd.f32 %v1048, %v1090
  %v1114 = vadd.f32 %v1049, %v1090
  %v1115 = vadd.f32 %v1050, %v1090
  %v1116 = vadd.f32 %v1051, %v1090
  %v1117 = vadd.f32 %v1052, %v1090
  %v1118 = vadd.f32 %v1053, %v1090
  %v1119 = vadd.f32 %v1054, %v1090
  %v1120 = vadd.f32 %v1055, %v1090
  %v1121 = vadd.f32 %v1056, %v1090
  %v1122 = vadd.f32 %v1057, %v1090
  %v1123 = vadd.f32 %v1058, %v1090
  %v1124 = vadd.f32 %v1059, %v1090
  %v1125 = vadd.f32 %v1060, %v1090
  %v1126 = vadd.f32 %v1061, %v1090
  %v1127 = vadd.f32 %v1062, %v1090
  %v1128 = vadd.f32 %v1063, %v1090
  %v1129 = vadd.f32 %v1064, %v1090
  %v1130 = vadd.f32 %v1065, %v1090
  %v1131 = vadd.f32 %v1066, %v1090
  %v1132 = vadd.f32 %v1067, %v1090
  %v1133 = vadd.f32 %v1068, %v1090
  %v1134 = vadd.f32 %v1069, %v1090
  %v1135 = vadd.f32 %v1070, %v1090
  %v1136 = vadd.f32 %v1071, %v1090
  %v1137 = vadd.f32 %v1072, %v1090
  %v1138 = vadd.f32 %v1073, %v1090
  %v1139 = vadd.f32 %v1074, %v1090
  %v1140 = vadd.f32 %v1075, %v1090
  %v1141 = vadd.f32 %v1076, %v1090
  %v1142 = vadd.f32 %v1077, %v1090
  %v1143 = vadd.f32 %v1078, %v1090
  %v1144 = vadd.f32 %v1079, %v1090
  %v1145 = vadd.f32 %v1080, %v1090
  %v1146 = vadd.f32 %v1081, %v1090
  %v1147 = vadd.f32 %v1082, %v1090
  %v1148 = vadd.f32 %v1083, %v1090
  %v1149 = vadd.f32 %v1084, %v1090
  %v1150 = vadd.f32 %v1085, %v1090
  %v1151 = vadd.f32 %v1086, %v1090
  %v1152 = vadd.f32 %v1087, %v1090
  %v1153 = vadd.f32 %v1088, %v1090
  %v1154 = vadd.f32 %v1089, %v1090
  %v1155 = vmax.f32 %v1091, 0.0
  %v1156 = vmax.f32 %v1092, 0.0
  %v1157 = vmax.f32 %v1093, 0.0
  %v1158 = vmax.f32 %v1094, 0.0
  %v1159 = vmax.f32 %v1095, 0.0
  %v1160 = vmax.f32 %v1096, 0.0
  %v1161 = vmax.f32 %v1097, 0.0
  %v1162 = vmax.f32 %v1098, 0.0
  %v1163 = vmax.f32 %v1099, 0.0
  %v1164 = vmax.f32 %v1100, 0.0
  %v1165 = vmax.f32 %v1101, 0.0
  %v1166 = vmax.f32 %v1102, 0.0
  %v1167 = vmax.f32 %v1103, 0.0
  %v1168 = vmax.f32 %v1104, 0.0
  %v1169 = vmax.f32 %v1105, 0.0
  %v1170 = vmax.f32 %v1106, 0.0
  %v1171 = vmax.f32 %v1107, 0.0
  %v1172 = vmax.f32 %v1108, 0.0
  %v1173 = vmax.f32 %v1109, 0.0
  %v1174 = vmax.f32 %v1110, 0.0
  %v1175 = vmax.f32 %v1111, 0.0
  %v1176 = vmax.f32 %v1112, 0.0
  %v1177 = vmax.f32 %v1113, 0.0
  %v1178 = vmax.f32 %v1114, 0.0
  %v1179 = vmax.f32 %v1115, 0.0
  %v1180 = vmax.f32 %v1116, 0.0
  %v1181 = vmax.f32 %v1117, 0.0
  %v1182 = vmax.f32 %v1118, 0.0
  %v1183 = vmax.f32 %v1119, 0.0
  %v1184 = vmax.f32 %v1120, 0.0
  %v1185 = vmax.f32 %v1121, 0.0
  %v1186 = vmax.f32 %v1122, 0.0
  %v1187 = vmax.f32 %v1123, 0.0
  %v1188 = vmax.f32 %v1124, 0.0
  %v1189 = vmax.f32 %v1125, 0.0
  %v1190 = vmax.f32 %v1126, 0.0
  %v1191 = vmax.f32 %v1127, 0.0
  %v1192 = vmax.f32 %v1128, 0.0
  %v1193 = vmax.f32 %v1129, 0.0
  %v1194 = vmax.f32 %v1130, 0.0
  %v1195 = vmax.f32 %v1131, 0.0
  %v1196 = vmax.f32 %v1132, 0.0
  %v1197 = vmax.f32 %v1133, 0.0
  %v1198 = vmax.f32 %v1134, 0.0
  %v1199 = vmax.f32 %v1135, 0.0
  %v1200 = vmax.f32 %v1136, 0.0
  %v1201 = vmax.f32 %v1137, 0.0
  %v1202 = vmax.f32 %v1138, 0.0
  %v1203 = vmax.f32 %v1139, 0.0
  %v1204 = vmax.f32 %v1140, 0.0
  %v1205 = vmax.f32 %v1141, 0.0
  %v1206 = vmax.f32 %v1142, 0.0
  %v1207 = vmax.f32 %v1143, 0.0
  %v1208 = vmax.f32 %v1144, 0.0
  %v1209 = vmax.f32 %v1145, 0.0
  %v1210 = vmax.f32 %v1146, 0.0
  %v1211 = vmax.f32 %v1147, 0.0
  %v1212 = vmax.f32 %v1148, 0.0
  %v1213 = vmax.f32 %v1149, 0.0
  %v1214 = vmax.f32 %v1150, 0.0
  %v1215 = vmax.f32 %v1151, 0.0
  %v1216 = vmax.f32 %v1152, 0.0
  %v1217 = vmax.f32 %v1153, 0.0
  %v1218 = vmax.f32 %v1154, 0.0
  %v1219 = vld [vmem:[%s2 + $0x18] sm:$0xff]
  %v1220 = vld [vmem:[%s2 + $0x20] sm:$0xff]
  %v1221 = vld [vmem:[%s2 + $0x28] sm:$0xff]
  %v1222 = vld [vmem:[%s2 + $0x30] sm:$0xff]
  %v1223 = vld [vmem:[%s2 + $0x38] sm:$0xff]
  %v1224 = vld [vmem:[%s2 + $0x40] sm:$0xff]
  %v1225 = vld [vmem:[%s2 + $0x48] sm:$0xff]
  %v1226 = vld [vmem:[%s2 + $0x50] sm:$0xff]
  %v1227 = vld [vmem:[%s2 + $0x58] sm:$0xff]
  %v1228 = vld [vmem:[%s2 + $0x60] sm:$0xff]
  %v1229 = vld [vmem:[%s2 + $0x68] sm:$0xff]
  %v1230 = vld [vmem:[%s2 + $0x70] sm:$0xff]
  %v1231 = vld [vmem:[%s2 + $0x78] sm:$0xff]
  %v1232 = vld [vmem:[%s2 + $0x80] sm:$0xff]
  %v1233 = vld [vmem:[%s2 + $0x88] sm:$0xff]
  %v1234 = vld [vmem:[%s2 + $0x90] sm:$0xff]
  %1235 = vmatpush.msra.mxu0 %v1234
  %1236 = vmatpush.msra.mxu0 %v1233
  %1237 = vmatpush.msra.mxu0 %v1232
  %1238 = vmatpush.msra.mxu0 %v1231
  %1239 = vmatpush.msra.mxu0 %v1230
  %1240 = vmatpush.msra.mxu0 %v1229
  %1241 = vmatpush.msra.mxu0 %v1228
  %1242 = vmatpush.msra.mxu0 %v1227
  %1243 = vmatpush.msra.mxu0 %v1226
  %1244 = vmatpush.msra.mxu0 %v1225
  %1245 = vmatpush.msra.mxu0 %v1224
  %1246 = vmatpush.msra.mxu0 %v1223
  %1247 = vmatpush.msra.mxu0 %v1222
  %1248 = vmatpush.msra.mxu0 %v1221
  %1249 = vmatpush.msra.mxu0 %v1220
  %1250 = vmatpush.msra.mxu0 %v1219
  %1251 = vmatmul.f32.gmra.mxu0 %v1155
  %v1252 = vpop.f32.mrf.mxu0
  %v1253 = vadd.f32 0.0, %v1252
  %1254 = vmatmul.f32.gmra.mxu0 %v1156
  %v1255 = vpop.f32.mrf.mxu0
  %v1256 = vadd.f32 0.0, %v1255
  %1257 = vmatmul.f32.gmra.mxu0 %v1157
  %v1258 = vpop.f32.mrf.mxu0
  %v1259 = vadd.f32 0.0, %v1258
  %1260 = vmatmul.f32.gmra.mxu0 %v1158
  %v1261 = vpop.f32.mrf.mxu0
  %v1262 = vadd.f32 0.0, %v1261
  %1263 = vmatmul.f32.gmra.mxu0 %v1159
  %v1264 = vpop.f32.mrf.mxu0
  %v1265 = vadd.f32 0.0, %v1264
  %1266 = vmatmul.f32.gmra.mxu0 %v1160
  %v1267 = vpop.f32.mrf.mxu0
  %v1268 = vadd.f32 0.0, %v1267
  %1269 = vmatmul.f32.gmra.mxu0 %v1161
  %v1270 = vpop.f32.mrf.mxu0
  %v1271 = vadd.f32 0.0, %v1270
  %1272 = vmatmul.f32.gmra.mxu0 %v1162
  %v1273 = vpop.f32.mrf.mxu0
  %v1274 = vadd.f32 0.0, %v1273
  %1275 = vmatmul.f32.gmra.mxu0 %v1163
  %v1276 = vpop.f32.mrf.mxu0
  %v1277 = vadd.f32 0.0, %v1276
  %1278 = vmatmul.f32.gmra.mxu0 %v1164
  %v1279 = vpop.f32.mrf.mxu0
  %v1280 = vadd.f32 0.0, %v1279
  %1281 = vmatmul.f32.gmra.mxu0 %v1165
  %v1282 = vpop.f32.mrf.mxu0
  %v1283 = vadd.f32 0.0, %v1282
  %1284 = vmatmul.f32.gmra.mxu0 %v1166
  %v1285 = vpop.f32.mrf.mxu0
  %v1286 = vadd.f32 0.0, %v1285
  %1287 = vmatmul.f32.gmra.mxu0 %v1167
  %v1288 = vpop.f32.mrf.mxu0
  %v1289 = vadd.f32 0.0, %v1288
  %1290 = vmatmul.f32.gmra.mxu0 %v1168
  %v1291 = vpop.f32.mrf.mxu0
  %v1292 = vadd.f32 0.0, %v1291
  %1293 = vmatmul.f32.gmra.mxu0 %v1169
  %v1294 = vpop.f32.mrf.mxu0
  %v1295 = vadd.f32 0.0, %v1294
  %1296 = vmatmul.f32.gmra.mxu0 %v1170
  %v1297 = vpop.f32.mrf.mxu0
  %v1298 = vadd.f32 0.0, %v1297
  %1299 = vmatmul.f32.gmra.mxu0 %v1171
  %v1300 = vpop.f32.mrf.mxu0
  %v1301 = vadd.f32 0.0, %v1300
  %1302 = vmatmul.f32.gmra.mxu0 %v1172
  %v1303 = vpop.f32.mrf.mxu0
  %v1304 = vadd.f32 0.0, %v1303
  %1305 = vmatmul.f32.gmra.mxu0 %v1173
  %v1306 = vpop.f32.mrf.mxu0
  %v1307 = vadd.f32 0.0, %v1306
  %1308 = vmatmul.f32.gmra.mxu0 %v1174
  %v1309 = vpop.f32.mrf.mxu0
  %v1310 = vadd.f32 0.0, %v1309
  %1311 = vmatmul.f32.gmra.mxu0 %v1175
  %v1312 = vpop.f32.mrf.mxu0
  %v1313 = vadd.f32 0.0, %v1312
  %1314 = vmatmul.f32.gmra.mxu0 %v1176
  %v1315 = vpop.f32.mrf.mxu0
  %v1316 = vadd.f32 0.0, %v1315
  %1317 = vmatmul.f32.gmra.mxu0 %v1177
  %v1318 = vpop.f32.mrf.mxu0
  %v1319 = vadd.f32 0.0, %v1318
  %1320 = vmatmul.f32.gmra.mxu0 %v1178
  %v1321 = vpop.f32.mrf.mxu0
  %v1322 = vadd.f32 0.0, %v1321
  %1323 = vmatmul.f32.gmra.mxu0 %v1179
  %v1324 = vpop.f32.mrf.mxu0
  %v1325 = vadd.f32 0.0, %v1324
  %1326 = vmatmul.f32.gmra.mxu0 %v1180
  %v1327 = vpop.f32.mrf.mxu0
  %v1328 = vadd.f32 0.0, %v1327
  %1329 = vmatmul.f32.gmra.mxu0 %v1181
  %v1330 = vpop.f32.mrf.mxu0
  %v1331 = vadd.f32 0.0, %v1330
  %1332 = vmatmul.f32.gmra.mxu0 %v1182
  %v1333 = vpop.f32.mrf.mxu0
  %v1334 = vadd.f32 0.0, %v1333
  %1335 = vmatmul.f32.gmra.mxu0 %v1183
  %v1336 = vpop.f32.mrf.mxu0
  %v1337 = vadd.f32 0.0, %v1336
  %1338 = vmatmul.f32.gmra.mxu0 %v1184
  %v1339 = vpop.f32.mrf.mxu0
  %v1340 = vadd.f32 0.0, %v1339
  %1341 = vmatmul.f32.gmra.mxu0 %v1185
  %v1342 = vpop.f32.mrf.mxu0
  %v1343 = vadd.f32 0.0, %v1342
  %1344 = vmatmul.f32.gmra.mxu0 %v1186
  %v1345 = vpop.f32.mrf.mxu0
  %v1346 = vadd.f32 0.0, %v1345
  %1347 = vmatmul.f32.gmra.mxu0 %v1187
  %v1348 = vpop.f32.mrf.mxu0
  %v1349 = vadd.f32 0.0, %v1348
  %1350 = vmatmul.f32.gmra.mxu0 %v1188
  %v1351 = vpop.f32.mrf.mxu0
  %v1352 = vadd.f32 0.0, %v1351
  %1353 = vmatmul.f32.gmra.mxu0 %v1189
  %v1354 = vpop.f32.mrf.mxu0
  %v1355 = vadd.f32 0.0, %v1354
  %1356 = vmatmul.f32.gmra.mxu0 %v1190
  %v1357 = vpop.f32.mrf.mxu0
  %v1358 = vadd.f32 0.0, %v1357
  %1359 = vmatmul.f32.gmra.mxu0 %v1191
  %v1360 = vpop.f32.mrf.mxu0
  %v1361 = vadd.f32 0.0, %v1360
  %1362 = vmatmul.f32.gmra.mxu0 %v1192
  %v1363 = vpop.f32.mrf.mxu0
  %v1364 = vadd.f32 0.0, %v1363
  %1365 = vmatmul.f32.gmra.mxu0 %v1193
  %v1366 = vpop.f32.mrf.mxu0
  %v1367 = vadd.f32 0.0, %v1366
  %1368 = vmatmul.f32.gmra.mxu0 %v1194
  %v1369 = vpop.f32.mrf.mxu0
  %v1370 = vadd.f32 0.0, %v1369
  %1371 = vmatmul.f32.gmra.mxu0 %v1195
  %v1372 = vpop.f32.mrf.mxu0
  %v1373 = vadd.f32 0.0, %v1372
  %1374 = vmatmul.f32.gmra.mxu0 %v1196
  %v1375 = vpop.f32.mrf.mxu0
  %v1376 = vadd.f32 0.0, %v1375
  %1377 = vmatmul.f32.gmra.mxu0 %v1197
  %v1378 = vpop.f32.mrf.mxu0
  %v1379 = vadd.f32 0.0, %v1378
  %1380 = vmatmul.f32.gmra.mxu0 %v1198
  %v1381 = vpop.f32.mrf.mxu0
  %v1382 = vadd.f32 0.0, %v1381
  %1383 = vmatmul.f32.gmra.mxu0 %v1199
  %v1384 = vpop.f32.mrf.mxu0
  %v1385 = vadd.f32 0.0, %v1384
  %1386 = vmatmul.f32.gmra.mxu0 %v1200
  %v1387 = vpop.f32.mrf.mxu0
  %v1388 = vadd.f32 0.0, %v1387
  %1389 = vmatmul.f32.gmra.mxu0 %v1201
  %v1390 = vpop.f32.mrf.mxu0
  %v1391 = vadd.f32 0.0, %v1390
  %1392 = vmatmul.f32.gmra.mxu0 %v1202
  %v1393 = vpop.f32.mrf.mxu0
  %v1394 = vadd.f32 0.0, %v1393
  %1395 = vmatmul.f32.gmra.mxu0 %v1203
  %v1396 = vpop.f32.mrf.mxu0
  %v1397 = vadd.f32 0.0, %v1396
  %1398 = vmatmul.f32.gmra.mxu0 %v1204
  %v1399 = vpop.f32.mrf.mxu0
  %v1400 = vadd.f32 0.0, %v1399
  %1401 = vmatmul.f32.gmra.mxu0 %v1205
  %v1402 = vpop.f32.mrf.mxu0
  %v1403 = vadd.f32 0.0, %v1402
  %1404 = vmatmul.f32.gmra.mxu0 %v1206
  %v1405 = vpop.f32.mrf.mxu0
  %v1406 = vadd.f32 0.0, %v1405
  %1407 = vmatmul.f32.gmra.mxu0 %v1207
  %v1408 = vpop.f32.mrf.mxu0
  %v1409 = vadd.f32 0.0, %v1408
  %1410 = vmatmul.f32.gmra.mxu0 %v1208
  %v1411 = vpop.f32.mrf.mxu0
  %v1412 = vadd.f32 0.0, %v1411
  %1413 = vmatmul.f32.gmra.mxu0 %v1209
  %v1414 = vpop.f32.mrf.mxu0
  %v1415 = vadd.f32 0.0, %v1414
  %1416 = vmatmul.f32.gmra.mxu0 %v1210
  %v1417 = vpop.f32.mrf.mxu0
  %v1418 = vadd.f32 0.0, %v1417
  %1419 = vmatmul.f32.gmra.mxu0 %v1211
  %v1420 = vpop.f32.mrf.mxu0
  %v1421 = vadd.f32 0.0, %v1420
  %1422 = vmatmul.f32.gmra.mxu0 %v1212
  %v1423 = vpop.f32.mrf.mxu0
  %v1424 = vadd.f32 0.0, %v1423
  %1425 = vmatmul.f32.gmra.mxu0 %v1213
  %v1426 = vpop.f32.mrf.mxu0
  %v1427 = vadd.f32 0.0, %v1426
  %1428 = vmatmul.f32.gmra.mxu0 %v1214
  %v1429 = vpop.f32.mrf.mxu0
  %v1430 = vadd.f32 0.0, %v1429
  %1431 = vmatmul.f32.gmra.mxu0 %v1215
  %v1432 = vpop.f32.mrf.mxu0
  %v1433 = vadd.f32 0.0, %v1432
  %1434 = vmatmul.f32.gmra.mxu0 %v1216
  %v1435 = vpop.f32.mrf.mxu0
  %v1436 = vadd.f32 0.0, %v1435
  %1437 = vmatmul.f32.gmra.mxu0 %v1217
  %v1438 = vpop.f32.mrf.mxu0
  %v1439 = vadd.f32 0.0, %v1438
  %1440 = vmatmul.f32.gmra.mxu0 %v1218
  %v1441 = vpop.f32.mrf.mxu0
  %v1442 = vadd.f32 0.0, %v1441
  %1443 = vdwg.mxu0
  %1444 = vmatpush.msra.mxu0 %v1298
  %1445 = vmatpush.msra.mxu0 %v1295
  %1446 = vmatpush.msra.mxu0 %v1292
  %1447 = vmatpush.msra.mxu0 %v1289
  %1448 = vmatpush.msra.mxu0 %v1286
  %1449 = vmatpush.msra.mxu0 %v1283
  %1450 = vmatpush.msra.mxu0 %v1280
  %1451 = vmatpush.msra.mxu0 %v1277
  %1452 = vmatpush.msra.mxu0 %v1274
  %1453 = vmatpush.msra.mxu0 %v1271
  %1454 = vmatpush.msra.mxu0 %v1268
  %1455 = vmatpush.msra.mxu0 %v1265
  %1456 = vmatpush.msra.mxu0 %v1262
  %1457 = vmatpush.msra.mxu0 %v1259
  %1458 = vmatpush.msra.mxu0 %v1256
  %1459 = vmatpush.msra.mxu0 %v1253
  %1460 = vmatmul.f32.gmra.mxu0 1.0
  %v1461 = vpop.f32.mrf.mxu0
  %v1462 = vadd.f32 0.0, %v1461
  %1463 = vdwg.mxu0
  %1464 = vmatpush.msra.mxu0 %v1346
  %1465 = vmatpush.msra.mxu0 %v1343
  %1466 = vmatpush.msra.mxu0 %v1340
  %1467 = vmatpush.msra.mxu0 %v1337
  %1468 = vmatpush.msra.mxu0 %v1334
  %1469 = vmatpush.msra.mxu0 %v1331
  %1470 = vmatpush.msra.mxu0 %v1328
  %1471 = vmatpush.msra.mxu0 %v1325
  %1472 = vmatpush.msra.mxu0 %v1322
  %1473 = vmatpush.msra.mxu0 %v1319
  %1474 = vmatpush.msra.mxu0 %v1316
  %1475 = vmatpush.msra.mxu0 %v1313
  %1476 = vmatpush.msra.mxu0 %v1310
  %1477 = vmatpush.msra.mxu0 %v1307
  %1478 = vmatpush.msra.mxu0 %v1304
  %1479 = vmatpush.msra.mxu0 %v1301
  %1480 = vmatmul.f32.gmra.mxu0 1.0
  %v1481 = vpop.f32.mrf.mxu0
  %v1482 = vadd.f32 %v1462, %v1481
  %1483 = vdwg.mxu0
  %1484 = vmatpush.msra.mxu0 %v1394
  %1485 = vmatpush.msra.mxu0 %v1391
  %1486 = vmatpush.msra.mxu0 %v1388
  %1487 = vmatpush.msra.mxu0 %v1385
  %1488 = vmatpush.msra.mxu0 %v1382
  %1489 = vmatpush.msra.mxu0 %v1379
  %1490 = vmatpush.msra.mxu0 %v1376
  %1491 = vmatpush.msra.mxu0 %v1373
  %1492 = vmatpush.msra.mxu0 %v1370
  %1493 = vmatpush.msra.mxu0 %v1367
  %1494 = vmatpush.msra.mxu0 %v1364
  %1495 = vmatpush.msra.mxu0 %v1361
  %1496 = vmatpush.msra.mxu0 %v1358
  %1497 = vmatpush.msra.mxu0 %v1355
  %1498 = vmatpush.msra.mxu0 %v1352
  %1499 = vmatpush.msra.mxu0 %v1349
  %1500 = vmatmul.f32.gmra.mxu0 1.0
  %v1501 = vpop.f32.mrf.mxu0
  %v1502 = vadd.f32 %v1482, %v1501
  %1503 = vdwg.mxu0
  %1504 = vmatpush.msra.mxu0 %v1442
  %1505 = vmatpush.msra.mxu0 %v1439
  %1506 = vmatpush.msra.mxu0 %v1436
  %1507 = vmatpush.msra.mxu0 %v1433
  %1508 = vmatpush.msra.mxu0 %v1430
  %1509 = vmatpush.msra.mxu0 %v1427
  %1510 = vmatpush.msra.mxu0 %v1424
  %1511 = vmatpush.msra.mxu0 %v1421
  %1512 = vmatpush.msra.mxu0 %v1418
  %1513 = vmatpush.msra.mxu0 %v1415
  %1514 = vmatpush.msra.mxu0 %v1412
  %1515 = vmatpush.msra.mxu0 %v1409
  %1516 = vmatpush.msra.mxu0 %v1406
  %1517 = vmatpush.msra.mxu0 %v1403
  %1518 = vmatpush.msra.mxu0 %v1400
  %1519 = vmatpush.msra.mxu0 %v1397
  %1520 = vmatmul.f32.gmra.mxu0 1.0
  %v1521 = vpop.f32.mrf.mxu0
  %v1522 = vadd.f32 %v1502, %v1521
  %1523 = vdwg.mxu0
  %v1524 = vmul.f32 %v1522, 0.001953125
  %v1525 = vmul.f32 %v1253, %v1253
  %v1526 = vmul.f32 %v1256, %v1256
  %v1527 = vmul.f32 %v1259, %v1259
  %v1528 = vmul.f32 %v1262, %v1262
  %v1529 = vmul.f32 %v1265, %v1265
  %v1530 = vmul.f32 %v1268, %v1268
  %v1531 = vmul.f32 %v1271, %v1271
  %v1532 = vmul.f32 %v1274, %v1274
  %v1533 = vmul.f32 %v1277, %v1277
  %v1534 = vmul.f32 %v1280, %v1280
  %v1535 = vmul.f32 %v1283, %v1283
  %v1536 = vmul.f32 %v1286, %v1286
  %v1537 = vmul.f32 %v1289, %v1289
  %v1538 = vmul.f32 %v1292, %v1292
  %v1539 = vmul.f32 %v1295, %v1295
  %v1540 = vmul.f32 %v1298, %v1298
  %v1541 = vmul.f32 %v1301, %v1301
  %v1542 = vmul.f32 %v1304, %v1304
  %v1543 = vmul.f32 %v1307, %v1307
  %v1544 = vmul.f32 %v1310, %v1310
  %v1545 = vmul.f32 %v1313, %v1313
  %v1546 = vmul.f32 %v1316, %v1316
  %v1547 = vmul.f32 %v1319, %v1319
  %v1548 = vmul.f32 %v1322, %v1322
  %v1549 = vmul.f32 %v1325, %v1325
  %v1550 = vmul.f32 %v1328, %v1328
  %v1551 = vmul.f32 %v1331, %v1331
  %v1552 = vmul.f32 %v1334, %v1334
  %v1553 = vmul.f32 %v1337, %v1337
  %v1554 = vmul.f32 %v1340, %v1340
  %v1555 = vmul.f32 %v1343, %v1343
  %v1556 = vmul.f32 %v1346, %v1346
  %v1557 = vmul.f32 %v1349, %v1349
  %v1558 = vmul.f32 %v1352, %v1352
  %v1559 = vmul.f32 %v1355, %v1355
  %v1560 = vmul.f32 %v1358, %v1358
  %v1561 = vmul.f32 %v1361, %v1361
  %v1562 = vmul.f32 %v1364, %v1364
  %v1563 = vmul.f32 %v1367, %v1367
  %v1564 = vmul.f32 %v1370, %v1370
  %v1565 = vmul.f32 %v1373, %v1373
  %v1566 = vmul.f32 %v1376, %v1376
  %v1567 = vmul.f32 %v1379, %v1379
  %v1568 = vmul.f32 %v1382, %v1382
  %v1569 = vmul.f32 %v1385, %v1385
  %v1570 = vmul.f32 %v1388, %v1388
  %v1571 = vmul.f32 %v1391, %v1391
  %v1572 = vmul.f32 %v1394, %v1394
  %v1573 = vmul.f32 %v1397, %v1397
  %v1574 = vmul.f32 %v1400, %v1400
  %v1575 = vmul.f32 %v1403, %v1403
  %v1576 = vmul.f32 %v1406, %v1406
  %v1577 = vmul.f32 %v1409, %v1409
  %v1578 = vmul.f32 %v1412, %v1412
  %v1579 = vmul.f32 %v1415, %v1415
  %v1580 = vmul.f32 %v1418, %v1418
  %v1581 = vmul.f32 %v1421, %v1421
  %v1582 = vmul.f32 %v1424, %v1424
  %v1583 = vmul.f32 %v1427, %v1427
  %v1584 = vmul.f32 %v1430, %v1430
  %v1585 = vmul.f32 %v1433, %v1433
  %v1586 = vmul.f32 %v1436, %v1436
  %v1587 = vmul.f32 %v1439, %v1439
  %v1588 = vmul.f32 %v1442, %v1442
  %1589 = vmatpush.msra.mxu0 %v1540
  %1590 = vmatpush.msra.mxu0 %v1539
  %1591 = vmatpush.msra.mxu0 %v1538
  %1592 = vmatpush.msra.mxu0 %v1537
  %1593 = vmatpush.msra.mxu0 %v1536
  %1594 = vmatpush.msra.mxu0 %v1535
  %1595 = vmatpush.msra.mxu0 %v1534
  %1596 = vmatpush.msra.mxu0 %v1533
  %1597 = vmatpush.msra.mxu0 %v1532
  %1598 = vmatpush.msra.mxu0 %v1531
  %1599 = vmatpush.msra.mxu0 %v1530
  %1600 = vmatpush.msra.mxu0 %v1529
  %1601 = vmatpush.msra.mxu0 %v1528
  %1602 = vmatpush.msra.mxu0 %v1527
  %1603 = vmatpush.msra.mxu0 %v1526
  %1604 = vmatpush.msra.mxu0 %v1525
  %1605 = vmatmul.f32.gmra.mxu0 1.0
  %v1606 = vpop.f32.mrf.mxu0
  %v1607 = vadd.f32 0.0, %v1606
  %1608 = vdwg.mxu0
  %1609 = vmatpush.msra.mxu0 %v1556
  %1610 = vmatpush.msra.mxu0 %v1555
  %1611 = vmatpush.msra.mxu0 %v1554
  %1612 = vmatpush.msra.mxu0 %v1553
  %1613 = vmatpush.msra.mxu0 %v1552
  %1614 = vmatpush.msra.mxu0 %v1551
  %1615 = vmatpush.msra.mxu0 %v1550
  %1616 = vmatpush.msra.mxu0 %v1549
  %1617 = vmatpush.msra.mxu0 %v1548
  %1618 = vmatpush.msra.mxu0 %v1547
  %1619 = vmatpush.msra.mxu0 %v1546
  %1620 = vmatpush.msra.mxu0 %v1545
  %1621 = vmatpush.msra.mxu0 %v1544
  %1622 = vmatpush.msra.mxu0 %v1543
  %1623 = vmatpush.msra.mxu0 %v1542
  %1624 = vmatpush.msra.mxu0 %v1541
  %1625 = vmatmul.f32.gmra.mxu0 1.0
  %v1626 = vpop.f32.mrf.mxu0
  %v1627 = vadd.f32 %v1607, %v1626
  %1628 = vdwg.mxu0
  %1629 = vmatpush.msra.mxu0 %v1572
  %1630 = vmatpush.msra.mxu0 %v1571
  %1631 = vmatpush.msra.mxu0 %v1570
  %1632 = vmatpush.msra.mxu0 %v1569
  %1633 = vmatpush.msra.mxu0 %v1568
  %1634 = vmatpush.msra.mxu0 %v1567
  %1635 = vmatpush.msra.mxu0 %v1566
  %1636 = vmatpush.msra.mxu0 %v1565
  %1637 = vmatpush.msra.mxu0 %v1564
  %1638 = vmatpush.msra.mxu0 %v1563
  %1639 = vmatpush.msra.mxu0 %v1562
  %1640 = vmatpush.msra.mxu0 %v1561
  %1641 = vmatpush.msra.mxu0 %v1560
  %1642 = vmatpush.msra.mxu0 %v1559
  %1643 = vmatpush.msra.mxu0 %v1558
  %1644 = vmatpush.msra.mxu0 %v1557
  %1645 = vmatmul.f32.gmra.mxu0 1.0
  %v1646 = vpop.f32.mrf.mxu0
  %v1647 = vadd.f32 %v1627, %v1646
  %1648 = vdwg.mxu0
  %1649 = vmatpush.msra.mxu0 %v1588
  %1650 = vmatpush.msra.mxu0 %v1587
  %1651 = vmatpush.msra.mxu0 %v1586
  %1652 = vmatpush.msra.mxu0 %v1585
  %1653 = vmatpush.msra.mxu0 %v1584
  %1654 = vmatpush.msra.mxu0 %v1583
  %1655 = vmatpush.msra.mxu0 %v1582
  %1656 = vmatpush.msra.mxu0 %v1581
  %1657 = vmatpush.msra.mxu0 %v1580
  %1658 = vmatpush.msra.mxu0 %v1579
  %1659 = vmatpush.msra.mxu0 %v1578
  %1660 = vmatpush.msra.mxu0 %v1577
  %1661 = vmatpush.msra.mxu0 %v1576
  %1662 = vmatpush.msra.mxu0 %v1575
  %1663 = vmatpush.msra.mxu0 %v1574
  %1664 = vmatpush.msra.mxu0 %v1573
  %1665 = vmatmul.f32.gmra.mxu0 1.0
  %v1666 = vpop.f32.mrf.mxu0
  %v1667 = vadd.f32 %v1647, %v1666
  %1668 = vdwg.mxu0
  %v1669 = vmul.f32 %v1667, 0.001953125
  %v1670 = vmul.f32 %v1524, %v1524
  %v1671 = vsub.f32 %v1669, %v1670
  %v1672 = vmax.f32 %v1671, 0.0
  %v1673 = vadd.f32 %v1672, 1e-05
  %v1674 = vrsqrt.pop %v1673
  %v1675 = vmul.f32 %v1674, %v1673
  %v1676 = vmul.f32 %v1675, %v1674
  %v1677 = vmul.f32 0.5, %v1676
  %v1678 = vsub.f32 1.5, %v1677
  %v1679 = vmul.f32 %v1674, %v1678
  %vm1680 = vweird.f32 %v1673
  %vm1681 = vweird.f32 %v1674
  %vm1682 = vmor %vm1680, %vm1681
  %v1683 = vsel %vm1682, %v1674, %v1679
  %v1685 = vrot.slane %v1683, 4
  %v1687 = vmul.f32 %v78, %v1685
  %v1689 = vrot.slane %v1687, 4
  %v1691 = vmul.f32 %v1524, %v1689
  %v1693 = vrot.slane %v1691, 3
  %v1695 = vsub.f32 %v78, %v1693
  %v1696 = vperm.slane %v1687, 4
  %v1697 = vmul.f32 %v1253, %v1696
  %v1698 = vmul.f32 %v1256, %v1696
  %v1699 = vmul.f32 %v1259, %v1696
  %v1700 = vmul.f32 %v1262, %v1696
  %v1701 = vmul.f32 %v1265, %v1696
  %v1702 = vmul.f32 %v1268, %v1696
  %v1703 = vmul.f32 %v1271, %v1696
  %v1704 = vmul.f32 %v1274, %v1696
  %v1705 = vmul.f32 %v1277, %v1696
  %v1706 = vmul.f32 %v1280, %v1696
  %v1707 = vmul.f32 %v1283, %v1696
  %v1708 = vmul.f32 %v1286, %v1696
  %v1709 = vmul.f32 %v1289, %v1696
  %v1710 = vmul.f32 %v1292, %v1696
  %v1711 = vmul.f32 %v1295, %v1696
  %v1712 = vmul.f32 %v1298, %v1696
  %v1713 = vmul.f32 %v1301, %v1696
  %v1714 = vmul.f32 %v1304, %v1696
  %v1715 = vmul.f32 %v1307, %v1696
  %v1716 = vmul.f32 %v1310, %v1696
  %v1717 = vmul.f32 %v1313, %v1696
  %v1718 = vmul.f32 %v1316, %v1696
  %v1719 = vmul.f32 %v1319, %v1696
  %v1720 = vmul.f32 %v1322, %v1696
  %v1721 = vmul.f32 %v1325, %v1696
  %v1722 = vmul.f32 %v1328, %v1696
  %v1723 = vmul.f32 %v1331, %v1696
  %v1724 = vmul.f32 %v1334, %v1696
  %v1725 = vmul.f32 %v1337, %v1696
  %v1726 = vmul.f32 %v1340, %v1696
  %v1727 = vmul.f32 %v1343, %v1696
  %v1728 = vmul.f32 %v1346, %v1696
  %v1729 = vmul.f32 %v1349, %v1696
  %v1730 = vmul.f32 %v1352, %v1696
  %v1731 = vmul.f32 %v1355, %v1696
  %v1732 = vmul.f32 %v1358, %v1696
  %v1733 = vmul.f32 %v1361, %v1696
  %v1734 = vmul.f32 %v1364, %v1696
  %v1735 = vmul.f32 %v1367, %v1696
  %v1736 = vmul.f32 %v1370, %v1696
  %v1737 = vmul.f32 %v1373, %v1696
  %v1738 = vmul.f32 %v1376, %v1696
  %v1739 = vmul.f32 %v1379, %v1696
  %v1740 = vmul.f32 %v1382, %v1696
  %v1741 = vmul.f32 %v1385, %v1696
  %v1742 = vmul.f32 %v1388, %v1696
  %v1743 = vmul.f32 %v1391, %v1696
  %v1744 = vmul.f32 %v1394, %v1696
  %v1745 = vmul.f32 %v1397, %v1696
  %v1746 = vmul.f32 %v1400, %v1696
  %v1747 = vmul.f32 %v1403, %v1696
  %v1748 = vmul.f32 %v1406, %v1696
  %v1749 = vmul.f32 %v1409, %v1696
  %v1750 = vmul.f32 %v1412, %v1696
  %v1751 = vmul.f32 %v1415, %v1696
  %v1752 = vmul.f32 %v1418, %v1696
  %v1753 = vmul.f32 %v1421, %v1696
  %v1754 = vmul.f32 %v1424, %v1696
  %v1755 = vmul.f32 %v1427, %v1696
  %v1756 = vmul.f32 %v1430, %v1696
  %v1757 = vmul.f32 %v1433, %v1696
  %v1758 = vmul.f32 %v1436, %v1696
  %v1759 = vmul.f32 %v1439, %v1696
  %v1760 = vmul.f32 %v1442, %v1696
  %v1761 = vperm.slane %v1695, 5
  %v1762 = vadd.f32 %v1697, %v1761
  %v1763 = vadd.f32 %v1698, %v1761
  %v1764 = vadd.f32 %v1699, %v1761
  %v1765 = vadd.f32 %v1700, %v1761
  %v1766 = vadd.f32 %v1701, %v1761
  %v1767 = vadd.f32 %v1702, %v1761
  %v1768 = vadd.f32 %v1703, %v1761
  %v1769 = vadd.f32 %v1704, %v1761
  %v1770 = vadd.f32 %v1705, %v1761
  %v1771 = vadd.f32 %v1706, %v1761
  %v1772 = vadd.f32 %v1707, %v1761
  %v1773 = vadd.f32 %v1708, %v1761
  %v1774 = vadd.f32 %v1709, %v1761
  %v1775 = vadd.f32 %v1710, %v1761
  %v1776 = vadd.f32 %v1711, %v1761
  %v1777 = vadd.f32 %v1712, %v1761
  %v1778 = vadd.f32 %v1713, %v1761
  %v1779 = vadd.f32 %v1714, %v1761
  %v1780 = vadd.f32 %v1715, %v1761
  %v1781 = vadd.f32 %v1716, %v1761
  %v1782 = vadd.f32 %v1717, %v1761
  %v1783 = vadd.f32 %v1718, %v1761
  %v1784 = vadd.f32 %v1719, %v1761
  %v1785 = vadd.f32 %v1720, %v1761
  %v1786 = vadd.f32 %v1721, %v1761
  %v1787 = vadd.f32 %v1722, %v1761
  %v1788 = vadd.f32 %v1723, %v1761
  %v1789 = vadd.f32 %v1724, %v1761
  %v1790 = vadd.f32 %v1725, %v1761
  %v1791 = vadd.f32 %v1726, %v1761
  %v1792 = vadd.f32 %v1727, %v1761
  %v1793 = vadd.f32 %v1728, %v1761
  %v1794 = vadd.f32 %v1729, %v1761
  %v1795 = vadd.f32 %v1730, %v1761
  %v1796 = vadd.f32 %v1731, %v1761
  %v1797 = vadd.f32 %v1732, %v1761
  %v1798 = vadd.f32 %v1733, %v1761
  %v1799 = vadd.f32 %v1734, %v1761
  %v1800 = vadd.f32 %v1735, %v1761
  %v1801 = vadd.f32 %v1736, %v1761
  %v1802 = vadd.f32 %v1737, %v1761
  %v1803 = vadd.f32 %v1738, %v1761
  %v1804 = vadd.f32 %v1739, %v1761
  %v1805 = vadd.f32 %v1740, %v1761
  %v1806 = vadd.f32 %v1741, %v1761
  %v1807 = vadd.f32 %v1742, %v1761
  %v1808 = vadd.f32 %v1743, %v1761
  %v1809 = vadd.f32 %v1744, %v1761
  %v1810 = vadd.f32 %v1745, %v1761
  %v1811 = vadd.f32 %v1746, %v1761
  %v1812 = vadd.f32 %v1747, %v1761
  %v1813 = vadd.f32 %v1748, %v1761
  %v1814 = vadd.f32 %v1749, %v1761
  %v1815 = vadd.f32 %v1750, %v1761
  %v1816 = vadd.f32 %v1751, %v1761
  %v1817 = vadd.f32 %v1752, %v1761
  %v1818 = vadd.f32 %v1753, %v1761
  %v1819 = vadd.f32 %v1754, %v1761
  %v1820 = vadd.f32 %v1755, %v1761
  %v1821 = vadd.f32 %v1756, %v1761
  %v1822 = vadd.f32 %v1757, %v1761
  %v1823 = vadd.f32 %v1758, %v1761
  %v1824 = vadd.f32 %v1759, %v1761
  %v1825 = vadd.f32 %v1760, %v1761
  %v1826 = vmax.f32 %v1762, 0.0
  %v1827 = vmax.f32 %v1763, 0.0
  %v1828 = vmax.f32 %v1764, 0.0
  %v1829 = vmax.f32 %v1765, 0.0
  %v1830 = vmax.f32 %v1766, 0.0
  %v1831 = vmax.f32 %v1767, 0.0
  %v1832 = vmax.f32 %v1768, 0.0
  %v1833 = vmax.f32 %v1769, 0.0
  %v1834 = vmax.f32 %v1770, 0.0
  %v1835 = vmax.f32 %v1771, 0.0
  %v1836 = vmax.f32 %v1772, 0.0
  %v1837 = vmax.f32 %v1773, 0.0
  %v1838 = vmax.f32 %v1774, 0.0
  %v1839 = vmax.f32 %v1775, 0.0
  %v1840 = vmax.f32 %v1776, 0.0
  %v1841 = vmax.f32 %v1777, 0.0
  %v1842 = vmax.f32 %v1778, 0.0
  %v1843 = vmax.f32 %v1779, 0.0
  %v1844 = vmax.f32 %v1780, 0.0
  %v1845 = vmax.f32 %v1781, 0.0
  %v1846 = vmax.f32 %v1782, 0.0
  %v1847 = vmax.f32 %v1783, 0.0
  %v1848 = vmax.f32 %v1784, 0.0
  %v1849 = vmax.f32 %v1785, 0.0
  %v1850 = vmax.f32 %v1786, 0.0
  %v1851 = vmax.f32 %v1787, 0.0
  %v1852 = vmax.f32 %v1788, 0.0
  %v1853 = vmax.f32 %v1789, 0.0
  %v1854 = vmax.f32 %v1790, 0.0
  %v1855 = vmax.f32 %v1791, 0.0
  %v1856 = vmax.f32 %v1792, 0.0
  %v1857 = vmax.f32 %v1793, 0.0
  %v1858 = vmax.f32 %v1794, 0.0
  %v1859 = vmax.f32 %v1795, 0.0
  %v1860 = vmax.f32 %v1796, 0.0
  %v1861 = vmax.f32 %v1797, 0.0
  %v1862 = vmax.f32 %v1798, 0.0
  %v1863 = vmax.f32 %v1799, 0.0
  %v1864 = vmax.f32 %v1800, 0.0
  %v1865 = vmax.f32 %v1801, 0.0
  %v1866 = vmax.f32 %v1802, 0.0
  %v1867 = vmax.f32 %v1803, 0.0
  %v1868 = vmax.f32 %v1804, 0.0
  %v1869 = vmax.f32 %v1805, 0.0
  %v1870 = vmax.f32 %v1806, 0.0
  %v1871 = vmax.f32 %v1807, 0.0
  %v1872 = vmax.f32 %v1808, 0.0
  %v1873 = vmax.f32 %v1809, 0.0
  %v1874 = vmax.f32 %v1810, 0.0
  %v1875 = vmax.f32 %v1811, 0.0
  %v1876 = vmax.f32 %v1812, 0.0
  %v1877 = vmax.f32 %v1813, 0.0
  %v1878 = vmax.f32 %v1814, 0.0
  %v1879 = vmax.f32 %v1815, 0.0
  %v1880 = vmax.f32 %v1816, 0.0
  %v1881 = vmax.f32 %v1817, 0.0
  %v1882 = vmax.f32 %v1818, 0.0
  %v1883 = vmax.f32 %v1819, 0.0
  %v1884 = vmax.f32 %v1820, 0.0
  %v1885 = vmax.f32 %v1821, 0.0
  %v1886 = vmax.f32 %v1822, 0.0
  %v1887 = vmax.f32 %v1823, 0.0
  %v1888 = vmax.f32 %v1824, 0.0
  %v1889 = vmax.f32 %v1825, 0.0
  %v1890 = vld [vmem:[%s2 + $0x98] sm:$0xff]
  %v1891 = vld [vmem:[%s2 + $0xa0] sm:$0xff]
  %v1892 = vld [vmem:[%s2 + $0xa8] sm:$0xff]
  %v1893 = vld [vmem:[%s2 + $0xb0] sm:$0xff]
  %v1894 = vld [vmem:[%s2 + $0xb8] sm:$0xff]
  %v1895 = vld [vmem:[%s2 + $0xc0] sm:$0xff]
  %v1896 = vld [vmem:[%s2 + $0xc8] sm:$0xff]
  %v1897 = vld [vmem:[%s2 + $0xd0] sm:$0xff]
  %v1898 = vld [vmem:[%s2 + $0xd8] sm:$0xff]
  %v1899 = vld [vmem:[%s2 + $0xe0] sm:$0xff]
  %v1900 = vld [vmem:[%s2 + $0xe8] sm:$0xff]
  %v1901 = vld [vmem:[%s2 + $0xf0] sm:$0xff]
  %v1902 = vld [vmem:[%s2 + $0xf8] sm:$0xff]
  %v1903 = vld [vmem:[%s2 + $0x100] sm:$0xff]
  %v1904 = vld [vmem:[%s2 + $0x108] sm:$0xff]
  %v1905 = vld [vmem:[%s2 + $0x110] sm:$0xff]
  %1906 = vmatpush.msra.mxu0 %v1905
  %1907 = vmatpush.msra.mxu0 %v1904
  %1908 = vmatpush.msra.mxu0 %v1903
  %1909 = vmatpush.msra.mxu0 %v1902
  %1910 = vmatpush.msra.mxu0 %v1901
  %1911 = vmatpush.msra.mxu0 %v1900
  %1912 = vmatpush.msra.mxu0 %v1899
  %1913 = vmatpush.msra.mxu0 %v1898
  %1914 = vmatpush.msra.mxu0 %v1897
  %1915 = vmatpush.msra.mxu0 %v1896
  %1916 = vmatpush.msra.mxu0 %v1895
  %1917 = vmatpush.msra.mxu0 %v1894
  %1918 = vmatpush.msra.mxu0 %v1893
  %1919 = vmatpush.msra.mxu0 %v1892
  %1920 = vmatpush.msra.mxu0 %v1891
  %1921 = vmatpush.msra.mxu0 %v1890
  %1922 = vmatmul.f32.gmra.mxu0 %v1826
  %v1923 = vpop.f32.mrf.mxu0
  %v1924 = vadd.f32 0.0, %v1923
  %1925 = vmatmul.f32.gmra.mxu0 %v1827
  %v1926 = vpop.f32.mrf.mxu0
  %v1927 = vadd.f32 0.0, %v1926
  %1928 = vmatmul.f32.gmra.mxu0 %v1828
  %v1929 = vpop.f32.mrf.mxu0
  %v1930 = vadd.f32 0.0, %v1929
  %1931 = vmatmul.f32.gmra.mxu0 %v1829
  %v1932 = vpop.f32.mrf.mxu0
  %v1933 = vadd.f32 0.0, %v1932
  %1934 = vmatmul.f32.gmra.mxu0 %v1830
  %v1935 = vpop.f32.mrf.mxu0
  %v1936 = vadd.f32 0.0, %v1935
  %1937 = vmatmul.f32.gmra.mxu0 %v1831
  %v1938 = vpop.f32.mrf.mxu0
  %v1939 = vadd.f32 0.0, %v1938
  %1940 = vmatmul.f32.gmra.mxu0 %v1832
  %v1941 = vpop.f32.mrf.mxu0
  %v1942 = vadd.f32 0.0, %v1941
  %1943 = vmatmul.f32.gmra.mxu0 %v1833
  %v1944 = vpop.f32.mrf.mxu0
  %v1945 = vadd.f32 0.0, %v1944
  %1946 = vmatmul.f32.gmra.mxu0 %v1834
  %v1947 = vpop.f32.mrf.mxu0
  %v1948 = vadd.f32 0.0, %v1947
  %1949 = vmatmul.f32.gmra.mxu0 %v1835
  %v1950 = vpop.f32.mrf.mxu0
  %v1951 = vadd.f32 0.0, %v1950
  %1952 = vmatmul.f32.gmra.mxu0 %v1836
  %v1953 = vpop.f32.mrf.mxu0
  %v1954 = vadd.f32 0.0, %v1953
  %1955 = vmatmul.f32.gmra.mxu0 %v1837
  %v1956 = vpop.f32.mrf.mxu0
  %v1957 = vadd.f32 0.0, %v1956
  %1958 = vmatmul.f32.gmra.mxu0 %v1838
  %v1959 = vpop.f32.mrf.mxu0
  %v1960 = vadd.f32 0.0, %v1959
  %1961 = vmatmul.f32.gmra.mxu0 %v1839
  %v1962 = vpop.f32.mrf.mxu0
  %v1963 = vadd.f32 0.0, %v1962
  %1964 = vmatmul.f32.gmra.mxu0 %v1840
  %v1965 = vpop.f32.mrf.mxu0
  %v1966 = vadd.f32 0.0, %v1965
  %1967 = vmatmul.f32.gmra.mxu0 %v1841
  %v1968 = vpop.f32.mrf.mxu0
  %v1969 = vadd.f32 0.0, %v1968
  %1970 = vmatmul.f32.gmra.mxu0 %v1842
  %v1971 = vpop.f32.mrf.mxu0
  %v1972 = vadd.f32 0.0, %v1971
  %1973 = vmatmul.f32.gmra.mxu0 %v1843
  %v1974 = vpop.f32.mrf.mxu0
  %v1975 = vadd.f32 0.0, %v1974
  %1976 = vmatmul.f32.gmra.mxu0 %v1844
  %v1977 = vpop.f32.mrf.mxu0
  %v1978 = vadd.f32 0.0, %v1977
  %1979 = vmatmul.f32.gmra.mxu0 %v1845
  %v1980 = vpop.f32.mrf.mxu0
  %v1981 = vadd.f32 0.0, %v1980
  %1982 = vmatmul.f32.gmra.mxu0 %v1846
  %v1983 = vpop.f32.mrf.mxu0
  %v1984 = vadd.f32 0.0, %v1983
  %1985 = vmatmul.f32.gmra.mxu0 %v1847
  %v1986 = vpop.f32.mrf.mxu0
  %v1987 = vadd.f32 0.0, %v1986
  %1988 = vmatmul.f32.gmra.mxu0 %v1848
  %v1989 = vpop.f32.mrf.mxu0
  %v1990 = vadd.f32 0.0, %v1989
  %1991 = vmatmul.f32.gmra.mxu0 %v1849
  %v1992 = vpop.f32.mrf.mxu0
  %v1993 = vadd.f32 0.0, %v1992
  %1994 = vmatmul.f32.gmra.mxu0 %v1850
  %v1995 = vpop.f32.mrf.mxu0
  %v1996 = vadd.f32 0.0, %v1995
  %1997 = vmatmul.f32.gmra.mxu0 %v1851
  %v1998 = vpop.f32.mrf.mxu0
  %v1999 = vadd.f32 0.0, %v1998
  %2000 = vmatmul.f32.gmra.mxu0 %v1852
  %v2001 = vpop.f32.mrf.mxu0
  %v2002 = vadd.f32 0.0, %v2001
  %2003 = vmatmul.f32.gmra.mxu0 %v1853
  %v2004 = vpop.f32.mrf.mxu0
  %v2005 = vadd.f32 0.0, %v2004
  %2006 = vmatmul.f32.gmra.mxu0 %v1854
  %v2007 = vpop.f32.mrf.mxu0
  %v2008 = vadd.f32 0.0, %v2007
  %2009 = vmatmul.f32.gmra.mxu0 %v1855
  %v2010 = vpop.f32.mrf.mxu0
  %v2011 = vadd.f32 0.0, %v2010
  %2012 = vmatmul.f32.gmra.mxu0 %v1856
  %v2013 = vpop.f32.mrf.mxu0
  %v2014 = vadd.f32 0.0, %v2013
  %2015 = vmatmul.f32.gmra.mxu0 %v1857
  %v2016 = vpop.f32.mrf.mxu0
  %v2017 = vadd.f32 0.0, %v2016
  %2018 = vmatmul.f32.gmra.mxu0 %v1858
  %v2019 = vpop.f32.mrf.mxu0
  %v2020 = vadd.f32 0.0, %v2019
  %2021 = vmatmul.f32.gmra.mxu0 %v1859
  %v2022 = vpop.f32.mrf.mxu0
  %v2023 = vadd.f32 0.0, %v2022
  %2024 = vmatmul.f32.gmra.mxu0 %v1860
  %v2025 = vpop.f32.mrf.mxu0
  %v2026 = vadd.f32 0.0, %v2025
  %2027 = vmatmul.f32.gmra.mxu0 %v1861
  %v2028 = vpop.f32.mrf.mxu0
  %v2029 = vadd.f32 0.0, %v2028
  %2030 = vmatmul.f32.gmra.mxu0 %v1862
  %v2031 = vpop.f32.mrf.mxu0
  %v2032 = vadd.f32 0.0, %v2031
  %2033 = vmatmul.f32.gmra.mxu0 %v1863
  %v2034 = vpop.f32.mrf.mxu0
  %v2035 = vadd.f32 0.0, %v2034
  %2036 = vmatmul.f32.gmra.mxu0 %v1864
  %v2037 = vpop.f32.mrf.mxu0
  %v2038 = vadd.f32 0.0, %v2037
  %2039 = vmatmul.f32.gmra.mxu0 %v1865
  %v2040 = vpop.f32.mrf.mxu0
  %v2041 = vadd.f32 0.0, %v2040
  %2042 = vmatmul.f32.gmra.mxu0 %v1866
  %v2043 = vpop.f32.mrf.mxu0
  %v2044 = vadd.f32 0.0, %v2043
  %2045 = vmatmul.f32.gmra.mxu0 %v1867
  %v2046 = vpop.f32.mrf.mxu0
  %v2047 = vadd.f32 0.0, %v2046
  %2048 = vmatmul.f32.gmra.mxu0 %v1868
  %v2049 = vpop.f32.mrf.mxu0
  %v2050 = vadd.f32 0.0, %v2049
  %2051 = vmatmul.f32.gmra.mxu0 %v1869
  %v2052 = vpop.f32.mrf.mxu0
  %v2053 = vadd.f32 0.0, %v2052
  %2054 = vmatmul.f32.gmra.mxu0 %v1870
  %v2055 = vpop.f32.mrf.mxu0
  %v2056 = vadd.f32 0.0, %v2055
  %2057 = vmatmul.f32.gmra.mxu0 %v1871
  %v2058 = vpop.f32.mrf.mxu0
  %v2059 = vadd.f32 0.0, %v2058
  %2060 = vmatmul.f32.gmra.mxu0 %v1872
  %v2061 = vpop.f32.mrf.mxu0
  %v2062 = vadd.f32 0.0, %v2061
  %2063 = vmatmul.f32.gmra.mxu0 %v1873
  %v2064 = vpop.f32.mrf.mxu0
  %v2065 = vadd.f32 0.0, %v2064
  %2066 = vmatmul.f32.gmra.mxu0 %v1874
  %v2067 = vpop.f32.mrf.mxu0
  %v2068 = vadd.f32 0.0, %v2067
  %2069 = vmatmul.f32.gmra.mxu0 %v1875
  %v2070 = vpop.f32.mrf.mxu0
  %v2071 = vadd.f32 0.0, %v2070
  %2072 = vmatmul.f32.gmra.mxu0 %v1876
  %v2073 = vpop.f32.mrf.mxu0
  %v2074 = vadd.f32 0.0, %v2073
  %2075 = vmatmul.f32.gmra.mxu0 %v1877
  %v2076 = vpop.f32.mrf.mxu0
  %v2077 = vadd.f32 0.0, %v2076
  %2078 = vmatmul.f32.gmra.mxu0 %v1878
  %v2079 = vpop.f32.mrf.mxu0
  %v2080 = vadd.f32 0.0, %v2079
  %2081 = vmatmul.f32.gmra.mxu0 %v1879
  %v2082 = vpop.f32.mrf.mxu0
  %v2083 = vadd.f32 0.0, %v2082
  %2084 = vmatmul.f32.gmra.mxu0 %v1880
  %v2085 = vpop.f32.mrf.mxu0
  %v2086 = vadd.f32 0.0, %v2085
  %2087 = vmatmul.f32.gmra.mxu0 %v1881
  %v2088 = vpop.f32.mrf.mxu0
  %v2089 = vadd.f32 0.0, %v2088
  %2090 = vmatmul.f32.gmra.mxu0 %v1882
  %v2091 = vpop.f32.mrf.mxu0
  %v2092 = vadd.f32 0.0, %v2091
  %2093 = vmatmul.f32.gmra.mxu0 %v1883
  %v2094 = vpop.f32.mrf.mxu0
  %v2095 = vadd.f32 0.0, %v2094
  %2096 = vmatmul.f32.gmra.mxu0 %v1884
  %v2097 = vpop.f32.mrf.mxu0
  %v2098 = vadd.f32 0.0, %v2097
  %2099 = vmatmul.f32.gmra.mxu0 %v1885
  %v2100 = vpop.f32.mrf.mxu0
  %v2101 = vadd.f32 0.0, %v2100
  %2102 = vmatmul.f32.gmra.mxu0 %v1886
  %v2103 = vpop.f32.mrf.mxu0
  %v2104 = vadd.f32 0.0, %v2103
  %2105 = vmatmul.f32.gmra.mxu0 %v1887
  %v2106 = vpop.f32.mrf.mxu0
  %v2107 = vadd.f32 0.0, %v2106
  %2108 = vmatmul.f32.gmra.mxu0 %v1888
  %v2109 = vpop.f32.mrf.mxu0
  %v2110 = vadd.f32 0.0, %v2109
  %2111 = vmatmul.f32.gmra.mxu0 %v1889
  %v2112 = vpop.f32.mrf.mxu0
  %v2113 = vadd.f32 0.0, %v2112
  %2114 = vdwg.mxu0
  %v2115 = vperm.slane %v78, 6
  %v2116 = vadd.f32 %v1924, %v2115
  %v2117 = vadd.f32 %v1927, %v2115
  %v2118 = vadd.f32 %v1930, %v2115
  %v2119 = vadd.f32 %v1933, %v2115
  %v2120 = vadd.f32 %v1936, %v2115
  %v2121 = vadd.f32 %v1939, %v2115
  %v2122 = vadd.f32 %v1942, %v2115
  %v2123 = vadd.f32 %v1945, %v2115
  %v2124 = vadd.f32 %v1948, %v2115
  %v2125 = vadd.f32 %v1951, %v2115
  %v2126 = vadd.f32 %v1954, %v2115
  %v2127 = vadd.f32 %v1957, %v2115
  %v2128 = vadd.f32 %v1960, %v2115
  %v2129 = vadd.f32 %v1963, %v2115
  %v2130 = vadd.f32 %v1966, %v2115
  %v2131 = vadd.f32 %v1969, %v2115
  %v2132 = vadd.f32 %v1972, %v2115
  %v2133 = vadd.f32 %v1975, %v2115
  %v2134 = vadd.f32 %v1978, %v2115
  %v2135 = vadd.f32 %v1981, %v2115
  %v2136 = vadd.f32 %v1984, %v2115
  %v2137 = vadd.f32 %v1987, %v2115
  %v2138 = vadd.f32 %v1990, %v2115
  %v2139 = vadd.f32 %v1993, %v2115
  %v2140 = vadd.f32 %v1996, %v2115
  %v2141 = vadd.f32 %v1999, %v2115
  %v2142 = vadd.f32 %v2002, %v2115
  %v2143 = vadd.f32 %v2005, %v2115
  %v2144 = vadd.f32 %v2008, %v2115
  %v2145 = vadd.f32 %v2011, %v2115
  %v2146 = vadd.f32 %v2014, %v2115
  %v2147 = vadd.f32 %v2017, %v2115
  %v2148 = vadd.f32 %v2020, %v2115
  %v2149 = vadd.f32 %v2023, %v2115
  %v2150 = vadd.f32 %v2026, %v2115
  %v2151 = vadd.f32 %v2029, %v2115
  %v2152 = vadd.f32 %v2032, %v2115
  %v2153 = vadd.f32 %v2035, %v2115
  %v2154 = vadd.f32 %v2038, %v2115
  %v2155 = vadd.f32 %v2041, %v2115
  %v2156 = vadd.f32 %v2044, %v2115
  %v2157 = vadd.f32 %v2047, %v2115
  %v2158 = vadd.f32 %v2050, %v2115
  %v2159 = vadd.f32 %v2053, %v2115
  %v2160 = vadd.f32 %v2056, %v2115
  %v2161 = vadd.f32 %v2059, %v2115
  %v2162 = vadd.f32 %v2062, %v2115
  %v2163 = vadd.f32 %v2065, %v2115
  %v2164 = vadd.f32 %v2068, %v2115
  %v2165 = vadd.f32 %v2071, %v2115
  %v2166 = vadd.f32 %v2074, %v2115
  %v2167 = vadd.f32 %v2077, %v2115
  %v2168 = vadd.f32 %v2080, %v2115
  %v2169 = vadd.f32 %v2083, %v2115
  %v2170 = vadd.f32 %v2086, %v2115
  %v2171 = vadd.f32 %v2089, %v2115
  %v2172 = vadd.f32 %v2092, %v2115
  %v2173 = vadd.f32 %v2095, %v2115
  %v2174 = vadd.f32 %v2098, %v2115
  %v2175 = vadd.f32 %v2101, %v2115
  %v2176 = vadd.f32 %v2104, %v2115
  %v2177 = vadd.f32 %v2107, %v2115
  %v2178 = vadd.f32 %v2110, %v2115
  %v2179 = vadd.f32 %v2113, %v2115
  %v2180 = vtanh.pop %v2116
  %v2181 = vtanh.pop %v2117
  %v2182 = vtanh.pop %v2118
  %v2183 = vtanh.pop %v2119
  %v2184 = vtanh.pop %v2120
  %v2185 = vtanh.pop %v2121
  %v2186 = vtanh.pop %v2122
  %v2187 = vtanh.pop %v2123
  %v2188 = vtanh.pop %v2124
  %v2189 = vtanh.pop %v2125
  %v2190 = vtanh.pop %v2126
  %v2191 = vtanh.pop %v2127
  %v2192 = vtanh.pop %v2128
  %v2193 = vtanh.pop %v2129
  %v2194 = vtanh.pop %v2130
  %v2195 = vtanh.pop %v2131
  %v2196 = vtanh.pop %v2132
  %v2197 = vtanh.pop %v2133
  %v2198 = vtanh.pop %v2134
  %v2199 = vtanh.pop %v2135
  %v2200 = vtanh.pop %v2136
  %v2201 = vtanh.pop %v2137
  %v2202 = vtanh.pop %v2138
  %v2203 = vtanh.pop %v2139
  %v2204 = vtanh.pop %v2140
  %v2205 = vtanh.pop %v2141
  %v2206 = vtanh.pop %v2142
  %v2207 = vtanh.pop %v2143
  %v2208 = vtanh.pop %v2144
  %v2209 = vtanh.pop %v2145
  %v2210 = vtanh.pop %v2146
  %v2211 = vtanh.pop %v2147
  %v2212 = vtanh.pop %v2148
  %v2213 = vtanh.pop %v2149
  %v2214 = vtanh.pop %v2150
  %v2215 = vtanh.pop %v2151
  %v2216 = vtanh.pop %v2152
  %v2217 = vtanh.pop %v2153
  %v2218 = vtanh.pop %v2154
  %v2219 = vtanh.pop %v2155
  %v2220 = vtanh.pop %v2156
  %v2221 = vtanh.pop %v2157
  %v2222 = vtanh.pop %v2158
  %v2223 = vtanh.pop %v2159
  %v2224 = vtanh.pop %v2160
  %v2225 = vtanh.pop %v2161
  %v2226 = vtanh.pop %v2162
  %v2227 = vtanh.pop %v2163
  %v2228 = vtanh.pop %v2164
  %v2229 = vtanh.pop %v2165
  %v2230 = vtanh.pop %v2166
  %v2231 = vtanh.pop %v2167
  %v2232 = vtanh.pop %v2168
  %v2233 = vtanh.pop %v2169
  %v2234 = vtanh.pop %v2170
  %v2235 = vtanh.pop %v2171
  %v2236 = vtanh.pop %v2172
  %v2237 = vtanh.pop %v2173
  %v2238 = vtanh.pop %v2174
  %v2239 = vtanh.pop %v2175
  %v2240 = vtanh.pop %v2176
  %v2241 = vtanh.pop %v2177
  %v2242 = vtanh.pop %v2178
  %v2243 = vtanh.pop %v2179
  %vm2244 = vcmask 64512
  %2245 = vst.msk [vmem:[%s3] sm:$0xff] %vm2244, %v2180
  %2246 = vst.msk [vmem:[%s3 + $0x8] sm:$0xff] %vm2244, %v2181
  %2247 = vst.msk [vmem:[%s3 + $0x10] sm:$0xff] %vm2244, %v2182
  %2248 = vst.msk [vmem:[%s3 + $0x18] sm:$0xff] %vm2244, %v2183
  %2249 = vst.msk [vmem:[%s3 + $0x20] sm:$0xff] %vm2244, %v2184
  %2250 = vst.msk [vmem:[%s3 + $0x28] sm:$0xff] %vm2244, %v2185
  %2251 = vst.msk [vmem:[%s3 + $0x30] sm:$0xff] %vm2244, %v2186
  %2252 = vst.msk [vmem:[%s3 + $0x38] sm:$0xff] %vm2244, %v2187
  %2253 = vst.msk [vmem:[%s3 + $0x40] sm:$0xff] %vm2244, %v2188
  %2254 = vst.msk [vmem:[%s3 + $0x48] sm:$0xff] %vm2244, %v2189
  %2255 = vst.msk [vmem:[%s3 + $0x50] sm:$0xff] %vm2244, %v2190
  %2256 = vst.msk [vmem:[%s3 + $0x58] sm:$0xff] %vm2244, %v2191
  %2257 = vst.msk [vmem:[%s3 + $0x60] sm:$0xff] %vm2244, %v2192
  %2258 = vst.msk [vmem:[%s3 + $0x68] sm:$0xff] %vm2244, %v2193
  %2259 = vst.msk [vmem:[%s3 + $0x70] sm:$0xff] %vm2244, %v2194
  %2260 = vst.msk [vmem:[%s3 + $0x78] sm:$0xff] %vm2244, %v2195
  %2261 = vst.msk [vmem:[%s3 + $0x80] sm:$0xff] %vm2244, %v2196
  %2262 = vst.msk [vmem:[%s3 + $0x88] sm:$0xff] %vm2244, %v2197
  %2263 = vst.msk [vmem:[%s3 + $0x90] sm:$0xff] %vm2244, %v2198
  %2264 = vst.msk [vmem:[%s3 + $0x98] sm:$0xff] %vm2244, %v2199
  %2265 = vst.msk [vmem:[%s3 + $0xa0] sm:$0xff] %vm2244, %v2200
  %2266 = vst.msk [vmem:[%s3 + $0xa8] sm:$0xff] %vm2244, %v2201
  %2267 = vst.msk [vmem:[%s3 + $0xb0] sm:$0xff] %vm2244, %v2202
  %2268 = vst.msk [vmem:[%s3 + $0xb8] sm:$0xff] %vm2244, %v2203
  %2269 = vst.msk [vmem:[%s3 + $0xc0] sm:$0xff] %vm2244, %v2204
  %2270 = vst.msk [vmem:[%s3 + $0xc8] sm:$0xff] %vm2244, %v2205
  %2271 = vst.msk [vmem:[%s3 + $0xd0] sm:$0xff] %vm2244, %v2206
  %2272 = vst.msk [vmem:[%s3 + $0xd8] sm:$0xff] %vm2244, %v2207
  %2273 = vst.msk [vmem:[%s3 + $0xe0] sm:$0xff] %vm2244, %v2208
  %2274 = vst.msk [vmem:[%s3 + $0xe8] sm:$0xff] %vm2244, %v2209
  %2275 = vst.msk [vmem:[%s3 + $0xf0] sm:$0xff] %vm2244, %v2210
  %2276 = vst.msk [vmem:[%s3 + $0xf8] sm:$0xff] %vm2244, %v2211
  %2277 = vst.msk [vmem:[%s3 + $0x100] sm:$0xff] %vm2244, %v2212
  %2278 = vst.msk [vmem:[%s3 + $0x108] sm:$0xff] %vm2244, %v2213
  %2279 = vst.msk [vmem:[%s3 + $0x110] sm:$0xff] %vm2244, %v2214
  %2280 = vst.msk [vmem:[%s3 + $0x118] sm:$0xff] %vm2244, %v2215
  %2281 = vst.msk [vmem:[%s3 + $0x120] sm:$0xff] %vm2244, %v2216
  %2282 = vst.msk [vmem:[%s3 + $0x128] sm:$0xff] %vm2244, %v2217
  %2283 = vst.msk [vmem:[%s3 + $0x130] sm:$0xff] %vm2244, %v2218
  %2284 = vst.msk [vmem:[%s3 + $0x138] sm:$0xff] %vm2244, %v2219
  %2285 = vst.msk [vmem:[%s3 + $0x140] sm:$0xff] %vm2244, %v2220
  %2286 = vst.msk [vmem:[%s3 + $0x148] sm:$0xff] %vm2244, %v2221
  %2287 = vst.msk [vmem:[%s3 + $0x150] sm:$0xff] %vm2244, %v2222
  %2288 = vst.msk [vmem:[%s3 + $0x158] sm:$0xff] %vm2244, %v2223
  %2289 = vst.msk [vmem:[%s3 + $0x160] sm:$0xff] %vm2244, %v2224
  %2290 = vst.msk [vmem:[%s3 + $0x168] sm:$0xff] %vm2244, %v2225
  %2291 = vst.msk [vmem:[%s3 + $0x170] sm:$0xff] %vm2244, %v2226
  %2292 = vst.msk [vmem:[%s3 + $0x178] sm:$0xff] %vm2244, %v2227
  %2293 = vst.msk [vmem:[%s3 + $0x180] sm:$0xff] %vm2244, %v2228
  %2294 = vst.msk [vmem:[%s3 + $0x188] sm:$0xff] %vm2244, %v2229
  %2295 = vst.msk [vmem:[%s3 + $0x190] sm:$0xff] %vm2244, %v2230
  %2296 = vst.msk [vmem:[%s3 + $0x198] sm:$0xff] %vm2244, %v2231
  %2297 = vst.msk [vmem:[%s3 + $0x1a0] sm:$0xff] %vm2244, %v2232
  %2298 = vst.msk [vmem:[%s3 + $0x1a8] sm:$0xff] %vm2244, %v2233
  %2299 = vst.msk [vmem:[%s3 + $0x1b0] sm:$0xff] %vm2244, %v2234
  %2300 = vst.msk [vmem:[%s3 + $0x1b8] sm:$0xff] %vm2244, %v2235
  %2301 = vst.msk [vmem:[%s3 + $0x1c0] sm:$0xff] %vm2244, %v2236
  %2302 = vst.msk [vmem:[%s3 + $0x1c8] sm:$0xff] %vm2244, %v2237
  %2303 = vst.msk [vmem:[%s3 + $0x1d0] sm:$0xff] %vm2244, %v2238
  %2304 = vst.msk [vmem:[%s3 + $0x1d8] sm:$0xff] %vm2244, %v2239
  %2305 = vst.msk [vmem:[%s3 + $0x1e0] sm:$0xff] %vm2244, %v2240
  %2306 = vst.msk [vmem:[%s3 + $0x1e8] sm:$0xff] %vm2244, %v2241
  %2307 = vst.msk [vmem:[%s3 + $0x1f0] sm:$0xff] %vm2244, %v2242
  %2308 = vst.msk [vmem:[%s3 + $0x1f8] sm:$0xff] %vm2244, %v2243
  // Predicated region
  $region14: #{actor_forward.1} parent=0 // pred_check
    _
  $region15: #{actor_forward.1} parent=0 // pred_check_branch
    %2310 = sbr.rel (0) target = $region17
  $region16: #{actor_forward.1} parent=0 // pred_region
    _
  $region17: #{actor_forward.1} parent=0 // pred_fallthru
    _
  // Predicated region
  $region18: #{actor_forward.1} parent=0 // pred_check
    _
  $region19: #{actor_forward.1} parent=0 // pred_check_branch
    %2312 = sbr.rel (0) target = $region21
  $region20: #{actor_forward.1} parent=0 // pred_region
    _
  $region21: #{actor_forward.1} parent=0 // pred_fallthru
    _

</llo_original>
